<compile_context>
chip_gen: v6e
topology: v6e:2x2x1
jax: 0.10.0
libtpu: 0.0.40
codegen_flags: <defaults>
</compile_context>

<pallas_src>
import jax
import jax.numpy as jnp
from jax.experimental import pallas as pl
from jax.experimental.pallas import tpu as pltpu  # noqa: F401  (TPU backend)


def _lstm_fc_softmax_kernel(xproj_ref, wh1_ref, w2_ref, b2_ref,
                            wfc_ref, bfc_ref, out_ref):
    T, B, G = xproj_ref.shape      # G = 4H
    H = G // 4

    # Weights / biases loaded once, outside the recurrence.
    wh1 = wh1_ref[...]                                   # (H, 4H)
    w2 = w2_ref[...]                                     # (2H, 4H)
    b2 = jnp.broadcast_to(b2_ref[...], (B, G))           # hoisted broadcast

    def gates_to_hc(gates, c):
        # Apply activations to the whole packed 4H tensor (2 EUP pushes),
        # then take lane slices.
        s = jax.nn.sigmoid(gates)
        t = jnp.tanh(gates)
        i = s[:, 0 * H:1 * H]
        f = s[:, 1 * H:2 * H]
        g = t[:, 2 * H:3 * H]
        o = s[:, 3 * H:4 * H]
        c_new = f * c + i * g
        h_new = o * jnp.tanh(c_new)
        return h_new, c_new

    def step(t, carry):
        h1, c1, h2, c2 = carry
        # Layer 1: input projection precomputed (b1 folded in); only the
        # recurrent matmul stays on the serial chain.
        gates1 = xproj_ref[t] + jnp.dot(h1, wh1,
                                        preferred_element_type=jnp.float32)
        h1, c1 = gates_to_hc(gates1, c1)
        # Inter-layer dropout (p=0.5) omitted -- identity (eval mode).
        # Layer 2: single fused matmul over stacked [Wx2; Wh2].
        x2 = jnp.concatenate([h1, h2], axis=-1)          # (B, 2H)
        gates2 = jnp.dot(x2, w2,
                         preferred_element_type=jnp.float32) + b2
        h2, c2 = gates_to_hc(gates2, c2)
        return h1, c1, h2, c2

    zeros = jnp.zeros((B, H), jnp.float32)
    _, _, h2, _ = jax.lax.fori_loop(0, T, step,
                                    (zeros, zeros, zeros, zeros),
                                    unroll=True)

    # Final dropout (p=0.5) omitted -- identity (eval mode).
    logits = (jnp.dot(h2, wfc_ref[...], preferred_element_type=jnp.float32)
              + bfc_ref[...])
    # Exact softmax: the (B, O=4) tile is tiny and off the critical path, so
    # use a true divide (the approx EUP reciprocal broke sum-to-one by >1e-3).
    m = jnp.max(logits, axis=1, keepdims=True)
    e = jnp.exp(logits - m)
    denom = jnp.sum(e, axis=1, keepdims=True)
    out_ref[...] = e / denom


def nn_forward(sentence, params):
    """sentence: int32 (B, T) token ids. Returns softmax probs (B, O)."""
    # Embedding gather is glue -- done in plain JAX; it fuses with the hoisted
    # layer-1 input projection below (single XLA fusion feeding the kernel).
    embeds = jnp.take(params["embedding"], sentence, axis=0).astype(jnp.float32)
    B, T, E = embeds.shape
    O = params["wfc"].shape[1]

    # Hoisted layer-1 input projection, time-major, with b1 folded in:
    # (T, B, 4H) -- one well-shaped matmul instead of T tiny K=E matmuls on
    # the recurrent critical path.
    x_proj = (jnp.einsum("bte,eg->tbg", embeds, params["wx1"],
                         preferred_element_type=jnp.float32)
              + params["b1"])

    # Stacked layer-2 weights: gates2 = [h1, h2] @ [Wx2; Wh2] + b2.
    w2 = jnp.concatenate([params["wx2"], params["wh2"]], axis=0)   # (2H, 4H)

    args = (x_proj, params["wh1"], w2, params["b2"],
            params["wfc"], params["bfc"])

    def full_spec(shape):
        return pl.BlockSpec(shape, lambda: (0,) * len(shape))

    # NOTE: grid=() -> single TensorCore. At B=8 this is fine; if B/T/H scale
    # up, add a "parallel" batch grid axis (v7x has 2 TCs per chip).
    return pl.pallas_call(
        _lstm_fc_softmax_kernel,
        grid=(),
        in_specs=[full_spec(a.shape) for a in args],
        out_specs=full_spec((B, O)),
        out_shape=jax.ShapeDtypeStruct((B, O), jnp.float32),
    )(*args)


def nn_reference(sentence, params):
    """Pure-JAX reference for correctness checking."""
    embeds = jnp.take(params["embedding"], sentence, axis=0).astype(jnp.float32)
    B, T, E = embeds.shape
    H = params["wh1"].shape[0]

    def cell(x, h, c, wx, wh, b):
        gates = x @ wx + h @ wh + b
        i = jax.nn.sigmoid(gates[:, 0 * H:1 * H])
        f = jax.nn.sigmoid(gates[:, 1 * H:2 * H])
        g = jnp.tanh(gates[:, 2 * H:3 * H])
        o = jax.nn.sigmoid(gates[:, 3 * H:4 * H])
        c = f * c + i * g
        return o * jnp.tanh(c), c

    h1 = c1 = h2 = c2 = jnp.zeros((B, H), jnp.float32)
    for t in range(T):
        x_t = embeds[:, t, :]
        h1, c1 = cell(x_t, h1, c1, params["wx1"], params["wh1"], params["b1"])
        h2, c2 = cell(h1, h2, c2, params["wx2"], params["wh2"], params["b2"])
    logits = h2 @ params["wfc"] + params["bfc"]
    return jax.nn.softmax(logits, axis=1)


def init_params(key, vocab_size, embedding_dim, hidden_dim, output_dim):
    ks = jax.random.split(key, 10)
    H, E, O = hidden_dim, embedding_dim, output_dim
    s = 1.0 / jnp.sqrt(H)
    u = lambda k, shape: jax.random.uniform(k, shape, jnp.float32, -s, s)
    return {
        "embedding": jax.random.normal(ks[0], (vocab_size, E), jnp.float32),
        # layer 1 (input E)
        "wx1": u(ks[1], (E, 4 * H)),
        "wh1": u(ks[2], (H, 4 * H)),
        "b1": u(ks[3], (1, 4 * H)),          # = b_ih + b_hh combined
        # layer 2 (input H)
        "wx2": u(ks[4], (H, 4 * H)),
        "wh2": u(ks[5], (H, 4 * H)),
        "b2": u(ks[6], (1, 4 * H)),
        # fc
        "wfc": u(ks[7], (H, O)),
        "bfc": u(ks[8], (1, O)),
    }


if __name__ == "__main__":
    B, T = 8, 8
    vocab_size, embedding_dim, hidden_dim, output_dim = 50, 32, 32, 4

    key = jax.random.PRNGKey(0)
    k_params, k_tokens = jax.random.split(key)
    params = init_params(k_params, vocab_size, embedding_dim, hidden_dim,
                         output_dim)
    sentence = jax.random.randint(k_tokens, (B, T), 0, vocab_size,
                                  dtype=jnp.int32)

    out = nn_forward(sentence, params)
    out = jax.block_until_ready(out)

    ref = jax.block_until_ready(nn_reference(sentence, params))
    assert out.shape == (B, output_dim)
    assert jnp.allclose(out, ref, rtol=1e-3, atol=1e-5), "mismatch vs reference"
    assert jnp.allclose(jnp.sum(out, axis=1), 1.0, atol=1e-4)

    print("KERNEL_OK")
</pallas_src>

<mosaic_0001>
module attributes {stable_mosaic.version = 11 : i64} {
  func.func @_lstm_fc_softmax_kernel(%arg0: memref<8x8x128xf32, #tpu.memory_space<vmem>>, %arg1: memref<32x128xf32, #tpu.memory_space<vmem>>, %arg2: memref<64x128xf32, #tpu.memory_space<vmem>>, %arg3: memref<1x128xf32, #tpu.memory_space<vmem>>, %arg4: memref<32x4xf32, #tpu.memory_space<vmem>>, %arg5: memref<1x4xf32, #tpu.memory_space<vmem>>, %arg6: memref<8x4xf32, #tpu.memory_space<vmem>>) attributes {dimension_semantics = [], scalar_prefetch = 0 : i64, scratch_operands = 0 : i64, tpu.core_type = #tpu.core_type<tc>} {
    %c0 = arith.constant 0 : index
    %c0_0 = arith.constant 0 : index
    %0 = vector.load %arg1[%c0, %c0_0] : memref<32x128xf32, #tpu.memory_space<vmem>>, vector<32x128xf32>
    %c0_1 = arith.constant 0 : index
    %c0_2 = arith.constant 0 : index
    %1 = vector.load %arg2[%c0_1, %c0_2] : memref<64x128xf32, #tpu.memory_space<vmem>>, vector<64x128xf32>
    %c0_3 = arith.constant 0 : index
    %c0_4 = arith.constant 0 : index
    %2 = vector.load %arg3[%c0_3, %c0_4] : memref<1x128xf32, #tpu.memory_space<vmem>>, vector<1x128xf32>
    %3 = vector.shape_cast %2 : vector<1x128xf32> to vector<1x128xf32>
    %4 = vector.broadcast %3 : vector<1x128xf32> to vector<8x128xf32>
    %cst = arith.constant 0.000000e+00 : f32
    %5 = vector.broadcast %cst : f32 to vector<8x32xf32>
    %c0_i32 = arith.constant 0 : i32
    %6 = arith.index_cast %c0_i32 : i32 to index
    %c0_5 = arith.constant 0 : index
    %c0_6 = arith.constant 0 : index
    %7 = vector.load %arg0[%6, %c0_5, %c0_6] : memref<8x8x128xf32, #tpu.memory_space<vmem>>, vector<1x8x128xf32>
    %8 = vector.shape_cast %7 : vector<1x8x128xf32> to vector<8x128xf32>
    %cst_7 = arith.constant dense<0.000000e+00> : vector<8x128xf32>
    %9 = tpu.matmul %5, %0, %cst_7 {dimension_numbers = #tpu.dot_dimension_numbers<[1], [0], [0], [1], [0, 0, 1, 1], [], []>} : vector<8x32xf32>, vector<32x128xf32>, vector<8x128xf32> -> vector<8x128xf32>
    %10 = arith.addf %8, %9 : vector<8x128xf32>
    %11 = arith.negf %10 : vector<8x128xf32>
    %12 = math.exp %11 : vector<8x128xf32>
    %cst_8 = arith.constant 1.000000e+00 : f32
    %13 = vector.broadcast %cst_8 : f32 to vector<8x128xf32>
    %14 = arith.addf %13, %12 : vector<8x128xf32>
    %15 = arith.divf %13, %14 : vector<8x128xf32>
    %16 = math.tanh %10 : vector<8x128xf32>
    %17 = vector.extract_strided_slice %15 {offsets = [0, 0], sizes = [8, 32], strides = [1, 1]} : vector<8x128xf32> to vector<8x32xf32>
    %18 = vector.extract_strided_slice %15 {offsets = [0, 32], sizes = [8, 32], strides = [1, 1]} : vector<8x128xf32> to vector<8x32xf32>
    %19 = vector.extract_strided_slice %16 {offsets = [0, 64], sizes = [8, 32], strides = [1, 1]} : vector<8x128xf32> to vector<8x32xf32>
    %20 = vector.extract_strided_slice %15 {offsets = [0, 96], sizes = [8, 32], strides = [1, 1]} : vector<8x128xf32> to vector<8x32xf32>
    %21 = arith.mulf %18, %5 : vector<8x32xf32>
    %22 = arith.mulf %17, %19 : vector<8x32xf32>
    %23 = arith.addf %21, %22 : vector<8x32xf32>
    %24 = math.tanh %23 : vector<8x32xf32>
    %25 = arith.mulf %20, %24 : vector<8x32xf32>
    %26 = tpu.concatenate %25, %5 in 1 : vector<8x32xf32>, vector<8x32xf32> -> vector<8x64xf32>
    %cst_9 = arith.constant dense<0.000000e+00> : vector<8x128xf32>
    %27 = tpu.matmul %26, %1, %cst_9 {dimension_numbers = #tpu.dot_dimension_numbers<[1], [0], [0], [1], [0, 0, 1, 1], [], []>} : vector<8x64xf32>, vector<64x128xf32>, vector<8x128xf32> -> vector<8x128xf32>
    %28 = arith.addf %27, %4 : vector<8x128xf32>
    %29 = arith.negf %28 : vector<8x128xf32>
    %30 = math.exp %29 : vector<8x128xf32>
    %cst_10 = arith.constant 1.000000e+00 : f32
    %31 = vector.broadcast %cst_10 : f32 to vector<8x128xf32>
    %32 = arith.addf %31, %30 : vector<8x128xf32>
    %33 = arith.divf %31, %32 : vector<8x128xf32>
    %34 = math.tanh %28 : vector<8x128xf32>
    %35 = vector.extract_strided_slice %33 {offsets = [0, 0], sizes = [8, 32], strides = [1, 1]} : vector<8x128xf32> to vector<8x32xf32>
    %36 = vector.extract_strided_slice %33 {offsets = [0, 32], sizes = [8, 32], strides = [1, 1]} : vector<8x128xf32> to vector<8x32xf32>
    %37 = vector.extract_strided_slice %34 {offsets = [0, 64], sizes = [8, 32], strides = [1, 1]} : vector<8x128xf32> to vector<8x32xf32>
    %38 = vector.extract_strided_slice %33 {offsets = [0, 96], sizes = [8, 32], strides = [1, 1]} : vector<8x128xf32> to vector<8x32xf32>
    %39 = arith.mulf %36, %5 : vector<8x32xf32>
    %40 = arith.mulf %35, %37 : vector<8x32xf32>
    %41 = arith.addf %39, %40 : vector<8x32xf32>
    %42 = math.tanh %41 : vector<8x32xf32>
    %43 = arith.mulf %38, %42 : vector<8x32xf32>
    %c1_i32 = arith.constant 1 : i32
    %44 = arith.index_cast %c1_i32 : i32 to index
    %c0_11 = arith.constant 0 : index
    %c0_12 = arith.constant 0 : index
    %45 = vector.load %arg0[%44, %c0_11, %c0_12] : memref<8x8x128xf32, #tpu.memory_space<vmem>>, vector<1x8x128xf32>
    %46 = vector.shape_cast %45 : vector<1x8x128xf32> to vector<8x128xf32>
    %cst_13 = arith.constant dense<0.000000e+00> : vector<8x128xf32>
    %47 = tpu.matmul %25, %0, %cst_13 {dimension_numbers = #tpu.dot_dimension_numbers<[1], [0], [0], [1], [0, 0, 1, 1], [], []>} : vector<8x32xf32>, vector<32x128xf32>, vector<8x128xf32> -> vector<8x128xf32>
    %48 = arith.addf %46, %47 : vector<8x128xf32>
    %49 = arith.negf %48 : vector<8x128xf32>
    %50 = math.exp %49 : vector<8x128xf32>
    %cst_14 = arith.constant 1.000000e+00 : f32
    %51 = vector.broadcast %cst_14 : f32 to vector<8x128xf32>
    %52 = arith.addf %51, %50 : vector<8x128xf32>
    %53 = arith.divf %51, %52 : vector<8x128xf32>
    %54 = math.tanh %48 : vector<8x128xf32>
    %55 = vector.extract_strided_slice %53 {offsets = [0, 0], sizes = [8, 32], strides = [1, 1]} : vector<8x128xf32> to vector<8x32xf32>
    %56 = vector.extract_strided_slice %53 {offsets = [0, 32], sizes = [8, 32], strides = [1, 1]} : vector<8x128xf32> to vector<8x32xf32>
    %57 = vector.extract_strided_slice %54 {offsets = [0, 64], sizes = [8, 32], strides = [1, 1]} : vector<8x128xf32> to vector<8x32xf32>
    %58 = vector.extract_strided_slice %53 {offsets = [0, 96], sizes = [8, 32], strides = [1, 1]} : vector<8x128xf32> to vector<8x32xf32>
    %59 = arith.mulf %56, %23 : vector<8x32xf32>
    %60 = arith.mulf %55, %57 : vector<8x32xf32>
    %61 = arith.addf %59, %60 : vector<8x32xf32>
    %62 = math.tanh %61 : vector<8x32xf32>
    %63 = arith.mulf %58, %62 : vector<8x32xf32>
    %64 = tpu.concatenate %63, %43 in 1 : vector<8x32xf32>, vector<8x32xf32> -> vector<8x64xf32>
    %cst_15 = arith.constant dense<0.000000e+00> : vector<8x128xf32>
    %65 = tpu.matmul %64, %1, %cst_15 {dimension_numbers = #tpu.dot_dimension_numbers<[1], [0], [0], [1], [0, 0, 1, 1], [], []>} : vector<8x64xf32>, vector<64x128xf32>, vector<8x128xf32> -> vector<8x128xf32>
    %66 = arith.addf %65, %4 : vector<8x128xf32>
    %67 = arith.negf %66 : vector<8x128xf32>
    %68 = math.exp %67 : vector<8x128xf32>
    %cst_16 = arith.constant 1.000000e+00 : f32
    %69 = vector.broadcast %cst_16 : f32 to vector<8x128xf32>
    %70 = arith.addf %69, %68 : vector<8x128xf32>
    %71 = arith.divf %69, %70 : vector<8x128xf32>
    %72 = math.tanh %66 : vector<8x128xf32>
    %73 = vector.extract_strided_slice %71 {offsets = [0, 0], sizes = [8, 32], strides = [1, 1]} : vector<8x128xf32> to vector<8x32xf32>
    %74 = vector.extract_strided_slice %71 {offsets = [0, 32], sizes = [8, 32], strides = [1, 1]} : vector<8x128xf32> to vector<8x32xf32>
    %75 = vector.extract_strided_slice %72 {offsets = [0, 64], sizes = [8, 32], strides = [1, 1]} : vector<8x128xf32> to vector<8x32xf32>
    %76 = vector.extract_strided_slice %71 {offsets = [0, 96], sizes = [8, 32], strides = [1, 1]} : vector<8x128xf32> to vector<8x32xf32>
    %77 = arith.mulf %74, %41 : vector<8x32xf32>
    %78 = arith.mulf %73, %75 : vector<8x32xf32>
    %79 = arith.addf %77, %78 : vector<8x32xf32>
    %80 = math.tanh %79 : vector<8x32xf32>
    %81 = arith.mulf %76, %80 : vector<8x32xf32>
    %c2_i32 = arith.constant 2 : i32
    %82 = arith.index_cast %c2_i32 : i32 to index
    %c0_17 = arith.constant 0 : index
    %c0_18 = arith.constant 0 : index
    %83 = vector.load %arg0[%82, %c0_17, %c0_18] : memref<8x8x128xf32, #tpu.memory_space<vmem>>, vector<1x8x128xf32>
    %84 = vector.shape_cast %83 : vector<1x8x128xf32> to vector<8x128xf32>
    %cst_19 = arith.constant dense<0.000000e+00> : vector<8x128xf32>
    %85 = tpu.matmul %63, %0, %cst_19 {dimension_numbers = #tpu.dot_dimension_numbers<[1], [0], [0], [1], [0, 0, 1, 1], [], []>} : vector<8x32xf32>, vector<32x128xf32>, vector<8x128xf32> -> vector<8x128xf32>
    %86 = arith.addf %84, %85 : vector<8x128xf32>
    %87 = arith.negf %86 : vector<8x128xf32>
    %88 = math.exp %87 : vector<8x128xf32>
    %cst_20 = arith.constant 1.000000e+00 : f32
    %89 = vector.broadcast %cst_20 : f32 to vector<8x128xf32>
    %90 = arith.addf %89, %88 : vector<8x128xf32>
    %91 = arith.divf %89, %90 : vector<8x128xf32>
    %92 = math.tanh %86 : vector<8x128xf32>
    %93 = vector.extract_strided_slice %91 {offsets = [0, 0], sizes = [8, 32], strides = [1, 1]} : vector<8x128xf32> to vector<8x32xf32>
    %94 = vector.extract_strided_slice %91 {offsets = [0, 32], sizes = [8, 32], strides = [1, 1]} : vector<8x128xf32> to vector<8x32xf32>
    %95 = vector.extract_strided_slice %92 {offsets = [0, 64], sizes = [8, 32], strides = [1, 1]} : vector<8x128xf32> to vector<8x32xf32>
    %96 = vector.extract_strided_slice %91 {offsets = [0, 96], sizes = [8, 32], strides = [1, 1]} : vector<8x128xf32> to vector<8x32xf32>
    %97 = arith.mulf %94, %61 : vector<8x32xf32>
    %98 = arith.mulf %93, %95 : vector<8x32xf32>
    %99 = arith.addf %97, %98 : vector<8x32xf32>
    %100 = math.tanh %99 : vector<8x32xf32>
    %101 = arith.mulf %96, %100 : vector<8x32xf32>
    %102 = tpu.concatenate %101, %81 in 1 : vector<8x32xf32>, vector<8x32xf32> -> vector<8x64xf32>
    %cst_21 = arith.constant dense<0.000000e+00> : vector<8x128xf32>
    %103 = tpu.matmul %102, %1, %cst_21 {dimension_numbers = #tpu.dot_dimension_numbers<[1], [0], [0], [1], [0, 0, 1, 1], [], []>} : vector<8x64xf32>, vector<64x128xf32>, vector<8x128xf32> -> vector<8x128xf32>
    %104 = arith.addf %103, %4 : vector<8x128xf32>
    %105 = arith.negf %104 : vector<8x128xf32>
    %106 = math.exp %105 : vector<8x128xf32>
    %cst_22 = arith.constant 1.000000e+00 : f32
    %107 = vector.broadcast %cst_22 : f32 to vector<8x128xf32>
    %108 = arith.addf %107, %106 : vector<8x128xf32>
    %109 = arith.divf %107, %108 : vector<8x128xf32>
    %110 = math.tanh %104 : vector<8x128xf32>
    %111 = vector.extract_strided_slice %109 {offsets = [0, 0], sizes = [8, 32], strides = [1, 1]} : vector<8x128xf32> to vector<8x32xf32>
    %112 = vector.extract_strided_slice %109 {offsets = [0, 32], sizes = [8, 32], strides = [1, 1]} : vector<8x128xf32> to vector<8x32xf32>
    %113 = vector.extract_strided_slice %110 {offsets = [0, 64], sizes = [8, 32], strides = [1, 1]} : vector<8x128xf32> to vector<8x32xf32>
    %114 = vector.extract_strided_slice %109 {offsets = [0, 96], sizes = [8, 32], strides = [1, 1]} : vector<8x128xf32> to vector<8x32xf32>
    %115 = arith.mulf %112, %79 : vector<8x32xf32>
    %116 = arith.mulf %111, %113 : vector<8x32xf32>
    %117 = arith.addf %115, %116 : vector<8x32xf32>
    %118 = math.tanh %117 : vector<8x32xf32>
    %119 = arith.mulf %114, %118 : vector<8x32xf32>
    %c3_i32 = arith.constant 3 : i32
    %120 = arith.index_cast %c3_i32 : i32 to index
    %c0_23 = arith.constant 0 : index
    %c0_24 = arith.constant 0 : index
    %121 = vector.load %arg0[%120, %c0_23, %c0_24] : memref<8x8x128xf32, #tpu.memory_space<vmem>>, vector<1x8x128xf32>
    %122 = vector.shape_cast %121 : vector<1x8x128xf32> to vector<8x128xf32>
    %cst_25 = arith.constant dense<0.000000e+00> : vector<8x128xf32>
    %123 = tpu.matmul %101, %0, %cst_25 {dimension_numbers = #tpu.dot_dimension_numbers<[1], [0], [0], [1], [0, 0, 1, 1], [], []>} : vector<8x32xf32>, vector<32x128xf32>, vector<8x128xf32> -> vector<8x128xf32>
    %124 = arith.addf %122, %123 : vector<8x128xf32>
    %125 = arith.negf %124 : vector<8x128xf32>
    %126 = math.exp %125 : vector<8x128xf32>
    %cst_26 = arith.constant 1.000000e+00 : f32
    %127 = vector.broadcast %cst_26 : f32 to vector<8x128xf32>
    %128 = arith.addf %127, %126 : vector<8x128xf32>
    %129 = arith.divf %127, %128 : vector<8x128xf32>
    %130 = math.tanh %124 : vector<8x128xf32>
    %131 = vector.extract_strided_slice %129 {offsets = [0, 0], sizes = [8, 32], strides = [1, 1]} : vector<8x128xf32> to vector<8x32xf32>
    %132 = vector.extract_strided_slice %129 {offsets = [0, 32], sizes = [8, 32], strides = [1, 1]} : vector<8x128xf32> to vector<8x32xf32>
    %133 = vector.extract_strided_slice %130 {offsets = [0, 64], sizes = [8, 32], strides = [1, 1]} : vector<8x128xf32> to vector<8x32xf32>
    %134 = vector.extract_strided_slice %129 {offsets = [0, 96], sizes = [8, 32], strides = [1, 1]} : vector<8x128xf32> to vector<8x32xf32>
    %135 = arith.mulf %132, %99 : vector<8x32xf32>
    %136 = arith.mulf %131, %133 : vector<8x32xf32>
    %137 = arith.addf %135, %136 : vector<8x32xf32>
    %138 = math.tanh %137 : vector<8x32xf32>
    %139 = arith.mulf %134, %138 : vector<8x32xf32>
    %140 = tpu.concatenate %139, %119 in 1 : vector<8x32xf32>, vector<8x32xf32> -> vector<8x64xf32>
    %cst_27 = arith.constant dense<0.000000e+00> : vector<8x128xf32>
    %141 = tpu.matmul %140, %1, %cst_27 {dimension_numbers = #tpu.dot_dimension_numbers<[1], [0], [0], [1], [0, 0, 1, 1], [], []>} : vector<8x64xf32>, vector<64x128xf32>, vector<8x128xf32> -> vector<8x128xf32>
    %142 = arith.addf %141, %4 : vector<8x128xf32>
    %143 = arith.negf %142 : vector<8x128xf32>
    %144 = math.exp %143 : vector<8x128xf32>
    %cst_28 = arith.constant 1.000000e+00 : f32
    %145 = vector.broadcast %cst_28 : f32 to vector<8x128xf32>
    %146 = arith.addf %145, %144 : vector<8x128xf32>
    %147 = arith.divf %145, %146 : vector<8x128xf32>
    %148 = math.tanh %142 : vector<8x128xf32>
    %149 = vector.extract_strided_slice %147 {offsets = [0, 0], sizes = [8, 32], strides = [1, 1]} : vector<8x128xf32> to vector<8x32xf32>
    %150 = vector.extract_strided_slice %147 {offsets = [0, 32], sizes = [8, 32], strides = [1, 1]} : vector<8x128xf32> to vector<8x32xf32>
    %151 = vector.extract_strided_slice %148 {offsets = [0, 64], sizes = [8, 32], strides = [1, 1]} : vector<8x128xf32> to vector<8x32xf32>
    %152 = vector.extract_strided_slice %147 {offsets = [0, 96], sizes = [8, 32], strides = [1, 1]} : vector<8x128xf32> to vector<8x32xf32>
    %153 = arith.mulf %150, %117 : vector<8x32xf32>
    %154 = arith.mulf %149, %151 : vector<8x32xf32>
    %155 = arith.addf %153, %154 : vector<8x32xf32>
    %156 = math.tanh %155 : vector<8x32xf32>
    %157 = arith.mulf %152, %156 : vector<8x32xf32>
    %c4_i32 = arith.constant 4 : i32
    %158 = arith.index_cast %c4_i32 : i32 to index
    %c0_29 = arith.constant 0 : index
    %c0_30 = arith.constant 0 : index
    %159 = vector.load %arg0[%158, %c0_29, %c0_30] : memref<8x8x128xf32, #tpu.memory_space<vmem>>, vector<1x8x128xf32>
    %160 = vector.shape_cast %159 : vector<1x8x128xf32> to vector<8x128xf32>
    %cst_31 = arith.constant dense<0.000000e+00> : vector<8x128xf32>
    %161 = tpu.matmul %139, %0, %cst_31 {dimension_numbers = #tpu.dot_dimension_numbers<[1], [0], [0], [1], [0, 0, 1, 1], [], []>} : vector<8x32xf32>, vector<32x128xf32>, vector<8x128xf32> -> vector<8x128xf32>
    %162 = arith.addf %160, %161 : vector<8x128xf32>
    %163 = arith.negf %162 : vector<8x128xf32>
    %164 = math.exp %163 : vector<8x128xf32>
    %cst_32 = arith.constant 1.000000e+00 : f32
    %165 = vector.broadcast %cst_32 : f32 to vector<8x128xf32>
    %166 = arith.addf %165, %164 : vector<8x128xf32>
    %167 = arith.divf %165, %166 : vector<8x128xf32>
    %168 = math.tanh %162 : vector<8x128xf32>
    %169 = vector.extract_strided_slice %167 {offsets = [0, 0], sizes = [8, 32], strides = [1, 1]} : vector<8x128xf32> to vector<8x32xf32>
    %170 = vector.extract_strided_slice %167 {offsets = [0, 32], sizes = [8, 32], strides = [1, 1]} : vector<8x128xf32> to vector<8x32xf32>
    %171 = vector.extract_strided_slice %168 {offsets = [0, 64], sizes = [8, 32], strides = [1, 1]} : vector<8x128xf32> to vector<8x32xf32>
    %172 = vector.extract_strided_slice %167 {offsets = [0, 96], sizes = [8, 32], strides = [1, 1]} : vector<8x128xf32> to vector<8x32xf32>
    %173 = arith.mulf %170, %137 : vector<8x32xf32>
    %174 = arith.mulf %169, %171 : vector<8x32xf32>
    %175 = arith.addf %173, %174 : vector<8x32xf32>
    %176 = math.tanh %175 : vector<8x32xf32>
    %177 = arith.mulf %172, %176 : vector<8x32xf32>
    %178 = tpu.concatenate %177, %157 in 1 : vector<8x32xf32>, vector<8x32xf32> -> vector<8x64xf32>
    %cst_33 = arith.constant dense<0.000000e+00> : vector<8x128xf32>
    %179 = tpu.matmul %178, %1, %cst_33 {dimension_numbers = #tpu.dot_dimension_numbers<[1], [0], [0], [1], [0, 0, 1, 1], [], []>} : vector<8x64xf32>, vector<64x128xf32>, vector<8x128xf32> -> vector<8x128xf32>
    %180 = arith.addf %179, %4 : vector<8x128xf32>
    %181 = arith.negf %180 : vector<8x128xf32>
    %182 = math.exp %181 : vector<8x128xf32>
    %cst_34 = arith.constant 1.000000e+00 : f32
    %183 = vector.broadcast %cst_34 : f32 to vector<8x128xf32>
    %184 = arith.addf %183, %182 : vector<8x128xf32>
    %185 = arith.divf %183, %184 : vector<8x128xf32>
    %186 = math.tanh %180 : vector<8x128xf32>
    %187 = vector.extract_strided_slice %185 {offsets = [0, 0], sizes = [8, 32], strides = [1, 1]} : vector<8x128xf32> to vector<8x32xf32>
    %188 = vector.extract_strided_slice %185 {offsets = [0, 32], sizes = [8, 32], strides = [1, 1]} : vector<8x128xf32> to vector<8x32xf32>
    %189 = vector.extract_strided_slice %186 {offsets = [0, 64], sizes = [8, 32], strides = [1, 1]} : vector<8x128xf32> to vector<8x32xf32>
    %190 = vector.extract_strided_slice %185 {offsets = [0, 96], sizes = [8, 32], strides = [1, 1]} : vector<8x128xf32> to vector<8x32xf32>
    %191 = arith.mulf %188, %155 : vector<8x32xf32>
    %192 = arith.mulf %187, %189 : vector<8x32xf32>
    %193 = arith.addf %191, %192 : vector<8x32xf32>
    %194 = math.tanh %193 : vector<8x32xf32>
    %195 = arith.mulf %190, %194 : vector<8x32xf32>
    %c5_i32 = arith.constant 5 : i32
    %196 = arith.index_cast %c5_i32 : i32 to index
    %c0_35 = arith.constant 0 : index
    %c0_36 = arith.constant 0 : index
    %197 = vector.load %arg0[%196, %c0_35, %c0_36] : memref<8x8x128xf32, #tpu.memory_space<vmem>>, vector<1x8x128xf32>
    %198 = vector.shape_cast %197 : vector<1x8x128xf32> to vector<8x128xf32>
    %cst_37 = arith.constant dense<0.000000e+00> : vector<8x128xf32>
    %199 = tpu.matmul %177, %0, %cst_37 {dimension_numbers = #tpu.dot_dimension_numbers<[1], [0], [0], [1], [0, 0, 1, 1], [], []>} : vector<8x32xf32>, vector<32x128xf32>, vector<8x128xf32> -> vector<8x128xf32>
    %200 = arith.addf %198, %199 : vector<8x128xf32>
    %201 = arith.negf %200 : vector<8x128xf32>
    %202 = math.exp %201 : vector<8x128xf32>
    %cst_38 = arith.constant 1.000000e+00 : f32
    %203 = vector.broadcast %cst_38 : f32 to vector<8x128xf32>
    %204 = arith.addf %203, %202 : vector<8x128xf32>
    %205 = arith.divf %203, %204 : vector<8x128xf32>
    %206 = math.tanh %200 : vector<8x128xf32>
    %207 = vector.extract_strided_slice %205 {offsets = [0, 0], sizes = [8, 32], strides = [1, 1]} : vector<8x128xf32> to vector<8x32xf32>
    %208 = vector.extract_strided_slice %205 {offsets = [0, 32], sizes = [8, 32], strides = [1, 1]} : vector<8x128xf32> to vector<8x32xf32>
    %209 = vector.extract_strided_slice %206 {offsets = [0, 64], sizes = [8, 32], strides = [1, 1]} : vector<8x128xf32> to vector<8x32xf32>
    %210 = vector.extract_strided_slice %205 {offsets = [0, 96], sizes = [8, 32], strides = [1, 1]} : vector<8x128xf32> to vector<8x32xf32>
    %211 = arith.mulf %208, %175 : vector<8x32xf32>
    %212 = arith.mulf %207, %209 : vector<8x32xf32>
    %213 = arith.addf %211, %212 : vector<8x32xf32>
    %214 = math.tanh %213 : vector<8x32xf32>
    %215 = arith.mulf %210, %214 : vector<8x32xf32>
    %216 = tpu.concatenate %215, %195 in 1 : vector<8x32xf32>, vector<8x32xf32> -> vector<8x64xf32>
    %cst_39 = arith.constant dense<0.000000e+00> : vector<8x128xf32>
    %217 = tpu.matmul %216, %1, %cst_39 {dimension_numbers = #tpu.dot_dimension_numbers<[1], [0], [0], [1], [0, 0, 1, 1], [], []>} : vector<8x64xf32>, vector<64x128xf32>, vector<8x128xf32> -> vector<8x128xf32>
    %218 = arith.addf %217, %4 : vector<8x128xf32>
    %219 = arith.negf %218 : vector<8x128xf32>
    %220 = math.exp %219 : vector<8x128xf32>
    %cst_40 = arith.constant 1.000000e+00 : f32
    %221 = vector.broadcast %cst_40 : f32 to vector<8x128xf32>
    %222 = arith.addf %221, %220 : vector<8x128xf32>
    %223 = arith.divf %221, %222 : vector<8x128xf32>
    %224 = math.tanh %218 : vector<8x128xf32>
    %225 = vector.extract_strided_slice %223 {offsets = [0, 0], sizes = [8, 32], strides = [1, 1]} : vector<8x128xf32> to vector<8x32xf32>
    %226 = vector.extract_strided_slice %223 {offsets = [0, 32], sizes = [8, 32], strides = [1, 1]} : vector<8x128xf32> to vector<8x32xf32>
    %227 = vector.extract_strided_slice %224 {offsets = [0, 64], sizes = [8, 32], strides = [1, 1]} : vector<8x128xf32> to vector<8x32xf32>
    %228 = vector.extract_strided_slice %223 {offsets = [0, 96], sizes = [8, 32], strides = [1, 1]} : vector<8x128xf32> to vector<8x32xf32>
    %229 = arith.mulf %226, %193 : vector<8x32xf32>
    %230 = arith.mulf %225, %227 : vector<8x32xf32>
    %231 = arith.addf %229, %230 : vector<8x32xf32>
    %232 = math.tanh %231 : vector<8x32xf32>
    %233 = arith.mulf %228, %232 : vector<8x32xf32>
    %c6_i32 = arith.constant 6 : i32
    %234 = arith.index_cast %c6_i32 : i32 to index
    %c0_41 = arith.constant 0 : index
    %c0_42 = arith.constant 0 : index
    %235 = vector.load %arg0[%234, %c0_41, %c0_42] : memref<8x8x128xf32, #tpu.memory_space<vmem>>, vector<1x8x128xf32>
    %236 = vector.shape_cast %235 : vector<1x8x128xf32> to vector<8x128xf32>
    %cst_43 = arith.constant dense<0.000000e+00> : vector<8x128xf32>
    %237 = tpu.matmul %215, %0, %cst_43 {dimension_numbers = #tpu.dot_dimension_numbers<[1], [0], [0], [1], [0, 0, 1, 1], [], []>} : vector<8x32xf32>, vector<32x128xf32>, vector<8x128xf32> -> vector<8x128xf32>
    %238 = arith.addf %236, %237 : vector<8x128xf32>
    %239 = arith.negf %238 : vector<8x128xf32>
    %240 = math.exp %239 : vector<8x128xf32>
    %cst_44 = arith.constant 1.000000e+00 : f32
    %241 = vector.broadcast %cst_44 : f32 to vector<8x128xf32>
    %242 = arith.addf %241, %240 : vector<8x128xf32>
    %243 = arith.divf %241, %242 : vector<8x128xf32>
    %244 = math.tanh %238 : vector<8x128xf32>
    %245 = vector.extract_strided_slice %243 {offsets = [0, 0], sizes = [8, 32], strides = [1, 1]} : vector<8x128xf32> to vector<8x32xf32>
    %246 = vector.extract_strided_slice %243 {offsets = [0, 32], sizes = [8, 32], strides = [1, 1]} : vector<8x128xf32> to vector<8x32xf32>
    %247 = vector.extract_strided_slice %244 {offsets = [0, 64], sizes = [8, 32], strides = [1, 1]} : vector<8x128xf32> to vector<8x32xf32>
    %248 = vector.extract_strided_slice %243 {offsets = [0, 96], sizes = [8, 32], strides = [1, 1]} : vector<8x128xf32> to vector<8x32xf32>
    %249 = arith.mulf %246, %213 : vector<8x32xf32>
    %250 = arith.mulf %245, %247 : vector<8x32xf32>
    %251 = arith.addf %249, %250 : vector<8x32xf32>
    %252 = math.tanh %251 : vector<8x32xf32>
    %253 = arith.mulf %248, %252 : vector<8x32xf32>
    %254 = tpu.concatenate %253, %233 in 1 : vector<8x32xf32>, vector<8x32xf32> -> vector<8x64xf32>
    %cst_45 = arith.constant dense<0.000000e+00> : vector<8x128xf32>
    %255 = tpu.matmul %254, %1, %cst_45 {dimension_numbers = #tpu.dot_dimension_numbers<[1], [0], [0], [1], [0, 0, 1, 1], [], []>} : vector<8x64xf32>, vector<64x128xf32>, vector<8x128xf32> -> vector<8x128xf32>
    %256 = arith.addf %255, %4 : vector<8x128xf32>
    %257 = arith.negf %256 : vector<8x128xf32>
    %258 = math.exp %257 : vector<8x128xf32>
    %cst_46 = arith.constant 1.000000e+00 : f32
    %259 = vector.broadcast %cst_46 : f32 to vector<8x128xf32>
    %260 = arith.addf %259, %258 : vector<8x128xf32>
    %261 = arith.divf %259, %260 : vector<8x128xf32>
    %262 = math.tanh %256 : vector<8x128xf32>
    %263 = vector.extract_strided_slice %261 {offsets = [0, 0], sizes = [8, 32], strides = [1, 1]} : vector<8x128xf32> to vector<8x32xf32>
    %264 = vector.extract_strided_slice %261 {offsets = [0, 32], sizes = [8, 32], strides = [1, 1]} : vector<8x128xf32> to vector<8x32xf32>
    %265 = vector.extract_strided_slice %262 {offsets = [0, 64], sizes = [8, 32], strides = [1, 1]} : vector<8x128xf32> to vector<8x32xf32>
    %266 = vector.extract_strided_slice %261 {offsets = [0, 96], sizes = [8, 32], strides = [1, 1]} : vector<8x128xf32> to vector<8x32xf32>
    %267 = arith.mulf %264, %231 : vector<8x32xf32>
    %268 = arith.mulf %263, %265 : vector<8x32xf32>
    %269 = arith.addf %267, %268 : vector<8x32xf32>
    %270 = math.tanh %269 : vector<8x32xf32>
    %271 = arith.mulf %266, %270 : vector<8x32xf32>
    %c7_i32 = arith.constant 7 : i32
    %272 = arith.index_cast %c7_i32 : i32 to index
    %c0_47 = arith.constant 0 : index
    %c0_48 = arith.constant 0 : index
    %273 = vector.load %arg0[%272, %c0_47, %c0_48] : memref<8x8x128xf32, #tpu.memory_space<vmem>>, vector<1x8x128xf32>
    %274 = vector.shape_cast %273 : vector<1x8x128xf32> to vector<8x128xf32>
    %cst_49 = arith.constant dense<0.000000e+00> : vector<8x128xf32>
    %275 = tpu.matmul %253, %0, %cst_49 {dimension_numbers = #tpu.dot_dimension_numbers<[1], [0], [0], [1], [0, 0, 1, 1], [], []>} : vector<8x32xf32>, vector<32x128xf32>, vector<8x128xf32> -> vector<8x128xf32>
    %276 = arith.addf %274, %275 : vector<8x128xf32>
    %277 = arith.negf %276 : vector<8x128xf32>
    %278 = math.exp %277 : vector<8x128xf32>
    %cst_50 = arith.constant 1.000000e+00 : f32
    %279 = vector.broadcast %cst_50 : f32 to vector<8x128xf32>
    %280 = arith.addf %279, %278 : vector<8x128xf32>
    %281 = arith.divf %279, %280 : vector<8x128xf32>
    %282 = math.tanh %276 : vector<8x128xf32>
    %283 = vector.extract_strided_slice %281 {offsets = [0, 0], sizes = [8, 32], strides = [1, 1]} : vector<8x128xf32> to vector<8x32xf32>
    %284 = vector.extract_strided_slice %281 {offsets = [0, 32], sizes = [8, 32], strides = [1, 1]} : vector<8x128xf32> to vector<8x32xf32>
    %285 = vector.extract_strided_slice %282 {offsets = [0, 64], sizes = [8, 32], strides = [1, 1]} : vector<8x128xf32> to vector<8x32xf32>
    %286 = vector.extract_strided_slice %281 {offsets = [0, 96], sizes = [8, 32], strides = [1, 1]} : vector<8x128xf32> to vector<8x32xf32>
    %287 = arith.mulf %284, %251 : vector<8x32xf32>
    %288 = arith.mulf %283, %285 : vector<8x32xf32>
    %289 = arith.addf %287, %288 : vector<8x32xf32>
    %290 = math.tanh %289 : vector<8x32xf32>
    %291 = arith.mulf %286, %290 : vector<8x32xf32>
    %292 = tpu.concatenate %291, %271 in 1 : vector<8x32xf32>, vector<8x32xf32> -> vector<8x64xf32>
    %cst_51 = arith.constant dense<0.000000e+00> : vector<8x128xf32>
    %293 = tpu.matmul %292, %1, %cst_51 {dimension_numbers = #tpu.dot_dimension_numbers<[1], [0], [0], [1], [0, 0, 1, 1], [], []>} : vector<8x64xf32>, vector<64x128xf32>, vector<8x128xf32> -> vector<8x128xf32>
    %294 = arith.addf %293, %4 : vector<8x128xf32>
    %295 = arith.negf %294 : vector<8x128xf32>
    %296 = math.exp %295 : vector<8x128xf32>
    %cst_52 = arith.constant 1.000000e+00 : f32
    %297 = vector.broadcast %cst_52 : f32 to vector<8x128xf32>
    %298 = arith.addf %297, %296 : vector<8x128xf32>
    %299 = arith.divf %297, %298 : vector<8x128xf32>
    %300 = math.tanh %294 : vector<8x128xf32>
    %301 = vector.extract_strided_slice %299 {offsets = [0, 0], sizes = [8, 32], strides = [1, 1]} : vector<8x128xf32> to vector<8x32xf32>
    %302 = vector.extract_strided_slice %299 {offsets = [0, 32], sizes = [8, 32], strides = [1, 1]} : vector<8x128xf32> to vector<8x32xf32>
    %303 = vector.extract_strided_slice %300 {offsets = [0, 64], sizes = [8, 32], strides = [1, 1]} : vector<8x128xf32> to vector<8x32xf32>
    %304 = vector.extract_strided_slice %299 {offsets = [0, 96], sizes = [8, 32], strides = [1, 1]} : vector<8x128xf32> to vector<8x32xf32>
    %305 = arith.mulf %302, %269 : vector<8x32xf32>
    %306 = arith.mulf %301, %303 : vector<8x32xf32>
    %307 = arith.addf %305, %306 : vector<8x32xf32>
    %308 = math.tanh %307 : vector<8x32xf32>
    %309 = arith.mulf %304, %308 : vector<8x32xf32>
    %c8_i32 = arith.constant 8 : i32
    %c0_53 = arith.constant 0 : index
    %c0_54 = arith.constant 0 : index
    %310 = vector.load %arg4[%c0_53, %c0_54] : memref<32x4xf32, #tpu.memory_space<vmem>>, vector<32x4xf32>
    %cst_55 = arith.constant dense<0.000000e+00> : vector<8x4xf32>
    %311 = tpu.matmul %309, %310, %cst_55 {dimension_numbers = #tpu.dot_dimension_numbers<[1], [0], [0], [1], [0, 0, 1, 1], [], []>} : vector<8x32xf32>, vector<32x4xf32>, vector<8x4xf32> -> vector<8x4xf32>
    %c0_56 = arith.constant 0 : index
    %c0_57 = arith.constant 0 : index
    %312 = vector.load %arg5[%c0_56, %c0_57] : memref<1x4xf32, #tpu.memory_space<vmem>>, vector<1x4xf32>
    %313 = vector.broadcast %312 : vector<1x4xf32> to vector<8x4xf32>
    %314 = arith.addf %311, %313 : vector<8x4xf32>
    %cst_58 = arith.constant dense<0xFF800000> : vector<8xf32>
    %315 = vector.multi_reduction <maximumf>, %314, %cst_58 [1] : vector<8x4xf32> to vector<8xf32>
    %316 = vector.shape_cast %315 : vector<8xf32> to vector<8x1xf32>
    %317 = vector.broadcast %316 : vector<8x1xf32> to vector<8x4xf32>
    %318 = arith.subf %314, %317 : vector<8x4xf32>
    %319 = math.exp %318 : vector<8x4xf32>
    %cst_59 = arith.constant dense<0.000000e+00> : vector<8xf32>
    %320 = vector.multi_reduction <add>, %319, %cst_59 [1] : vector<8x4xf32> to vector<8xf32>
    %321 = vector.shape_cast %320 : vector<8xf32> to vector<8x1xf32>
    %322 = vector.broadcast %321 : vector<8x1xf32> to vector<8x4xf32>
    %323 = arith.divf %319, %322 : vector<8x4xf32>
    %c0_60 = arith.constant 0 : index
    %c0_61 = arith.constant 0 : index
    %324 = vector.load %arg6[%c0_60, %c0_61] : memref<8x4xf32, #tpu.memory_space<vmem>>, vector<8x4xf32>
    tpu.vector_store %arg6[%c0_60, %c0_61], %323 {strides = array<i32>} : memref<8x4xf32, #tpu.memory_space<vmem>>, vector<8x4xf32>,
    return
  }
}

</mosaic_0001>

<llo_original>
// kernel: tpu_custom_call.1
$region0: #{tpu_custom_call.1}
  #allocation0 [shape = 'u32[]', space=smem, size = 0x4, offset = 0x4, fixed_abs, tag = 'smem constant byte address 0x4 - core index']
  #allocation1 [shape = 'u32[144,128]{1,0:T(1,128)}', space=vmem, size = 0x12000, scoped, tag = 'internal scratch']
  %s0 = inlined_call_operand.hbm [shape: f32[8,8,128], index: 0, kind: input, shape index: {}]
  %s1 = inlined_call_operand.vmem [shape: f32[32,128], index: 1, kind: input, shape index: {}]
  %s2 = inlined_call_operand.hbm [shape: f32[64,128], index: 2, kind: input, shape index: {}]
  %s3 = inlined_call_operand.vmem [shape: f32[1,128], index: 3, kind: input, shape index: {}]
  %s4 = inlined_call_operand.vmem [shape: f32[32,4], index: 4, kind: input, shape index: {}]
  %s5 = inlined_call_operand.vmem [shape: f32[1,4], index: 5, kind: input, shape index: {}]
  %s6 = inlined_call_operand.vmem [shape: f32[8,4], index: 6, kind: output, shape index: {}]
  %s7 = sld [smem:[#allocation0]]
  $region42: #{tpu_custom_call.1} parent=0
    _
  %s9 = ssub.s32 1, %s7
  %s10 = scalar_select 0, %s9, %s7
  $region1: #{tpu_custom_call.1} parent=0
    #allocation2 [shape = 'u8[32768]{0}', space=vmem, size = 0x8000, scoped, tag = 'input window, operand 0, single buffered']
    #allocation3 [shape = 's32[1]{0}', space=sflag, size = 0x4, scoped, tag = 'scoped memory for tpu_custom_call.1']
    #allocation4 [shape = 'u8[32768]{0}', space=vmem, size = 0x8000, scoped, tag = 'input window, operand 2, single buffered']
    #allocation5 [shape = 's32[1]{0}', space=sflag, size = 0x4, scoped, tag = 'scoped memory for tpu_custom_call.1']
    %11 = vsyncpa [#allocation3], 0
    %12 = vsyncpa [#allocation5], 0
    // Predicated region
    $region2: #{tpu_custom_call.1} parent=1 // pred_check
      _
    $region3: #{tpu_custom_call.1} parent=1 // pred_check_branch
      %14 = sbr.rel (0) target = $region5
    $region4: #{tpu_custom_call.1} parent=1 // pred_region
      %s16 = ssub.s32 1024, 1024
      %17 = vsyncadd [#allocation3], %s16
      %s18 = sshll.u32 [#allocation2], 4
      %s19 = int_to_ptr.vmem [resolvable:$true] %s18
      %24 = dma.hbm_to_vmem [thread:$0]  %s0, 1024, %s19, [#allocation3], 128, 128, 8
    $region5: #{tpu_custom_call.1} parent=1 // pred_fallthru
      _
    // Predicated region
    $region6: #{tpu_custom_call.1} parent=1 // pred_check
      _
    $region7: #{tpu_custom_call.1} parent=1 // pred_check_branch
      %26 = sbr.rel (0) target = $region9
    $region8: #{tpu_custom_call.1} parent=1 // pred_region
      _
    $region9: #{tpu_custom_call.1} parent=1 // pred_fallthru
      _
    // Predicated region
    $region10: #{tpu_custom_call.1} parent=1 // pred_check
      _
    $region11: #{tpu_custom_call.1} parent=1 // pred_check_branch
      %28 = sbr.rel (0) target = $region13
    $region12: #{tpu_custom_call.1} parent=1 // pred_region
      %s30 = ssub.s32 1024, 1024
      %31 = vsyncadd [#allocation5], %s30
      %s32 = sshll.u32 [#allocation4], 4
      %s33 = int_to_ptr.vmem [resolvable:$true] %s32
      %38 = dma.hbm_to_vmem [thread:$0]  %s2, 1024, %s33, [#allocation5], 128, 128, 8
    $region13: #{tpu_custom_call.1} parent=1 // pred_fallthru
      _
    // Predicated region
    $region14: #{tpu_custom_call.1} parent=1 // pred_check
      _
    $region15: #{tpu_custom_call.1} parent=1 // pred_check_branch
      %40 = sbr.rel (0) target = $region17
    $region16: #{tpu_custom_call.1} parent=1 // pred_region
      _
    $region17: #{tpu_custom_call.1} parent=1 // pred_fallthru
      _
    // Predicated region
    $region18: #{tpu_custom_call.1} parent=1 // pred_check
      _
    $region19: #{tpu_custom_call.1} parent=1 // pred_check_branch
      %42 = sbr.rel (0) target = $region21
    $region20: #{tpu_custom_call.1} parent=1 // pred_region
      _
    $region21: #{tpu_custom_call.1} parent=1 // pred_fallthru
      _
    // Predicated region
    $region22: #{tpu_custom_call.1} parent=1 // pred_check
      _
    $region23: #{tpu_custom_call.1} parent=1 // pred_check_branch
      %44 = sbr.rel (0) target = $region25
    $region24: #{tpu_custom_call.1} parent=1 // pred_region
      _
    $region25: #{tpu_custom_call.1} parent=1 // pred_fallthru
      _
    // Predicated region
    $region26: #{tpu_custom_call.1} parent=1 // pred_check
      _
    $region27: #{tpu_custom_call.1} parent=1 // pred_check_branch
      %46 = sbr.rel (0) target = $region29
    $region28: #{tpu_custom_call.1} parent=1 // pred_region
      %47 = dma.done [#allocation3], 1024
    $region29: #{tpu_custom_call.1} parent=1 // pred_fallthru
      _
    // Predicated region
    $region30: #{tpu_custom_call.1} parent=1 // pred_check
      _
    $region31: #{tpu_custom_call.1} parent=1 // pred_check_branch
      %49 = sbr.rel (0) target = $region33
    $region32: #{tpu_custom_call.1} parent=1 // pred_region
      %50 = dma.done [#allocation5], 1024
    $region33: #{tpu_custom_call.1} parent=1 // pred_fallthru
      _
    %v51 = vld [vmem:[%s1] sm:$0xff]
    %v52 = vld [vmem:[%s1 + $0x8] sm:$0xff]
    %v53 = vld [vmem:[%s1 + $0x10] sm:$0xff]
    %v54 = vld [vmem:[%s1 + $0x18] sm:$0xff]
    %v55 = vld [vmem:[#allocation4] sm:$0xff]
    %v56 = vld [vmem:[#allocation4 + $0x8] sm:$0xff]
    %v57 = vld [vmem:[#allocation4 + $0x10] sm:$0xff]
    %v58 = vld [vmem:[#allocation4 + $0x18] sm:$0xff]
    %v59 = vld [vmem:[#allocation4 + $0x20] sm:$0xff]
    %v60 = vld [vmem:[#allocation4 + $0x28] sm:$0xff]
    %v61 = vld [vmem:[#allocation4 + $0x30] sm:$0xff]
    %v62 = vld [vmem:[#allocation4 + $0x38] sm:$0xff]
    %v63 = vld [vmem:[%s3] sm:$0x1]
    %v65 = vlaneseq
    %v66 = vshrl.u32 %v65, 7
    %v67 = vsub.s32 0, %v66
    %v68 = vrot.slane %v63, %v67
    %v70 = vld [vmem:[#allocation2] sm:$0xff]
    %vm71 = vcmask 261120
    %v73 = vsel %vm71, 0.0, 0
    %75 = vmatprep.subr.mxu0 0.0
    %76 = vmatpush1.msra.mxu0 0.0
    %77 = vmatprep.subr.mxu0 0.0
    %78 = vmatpush1.msra.mxu0 0.0
    %79 = vmatprep.subr.mxu0 0.0
    %80 = vmatpush1.msra.mxu0 0.0
    %81 = vmatprep.subr.mxu0 0.0
    %82 = vmatpush1.msra.mxu0 0.0
    %83 = vmatprep.subr.mxu0 0.0
    %84 = vmatpush1.msra.mxu0 0.0
    %85 = vmatprep.subr.mxu0 0.0
    %86 = vmatpush1.msra.mxu0 0.0
    %87 = vmatprep.subr.mxu0 0.0
    %88 = vmatpush1.msra.mxu0 0.0
    %89 = vmatprep.subr.mxu0 0.0
    %90 = vmatpush1.msra.mxu0 0.0
    %91 = vmatprep.subr.mxu0 0.0
    %92 = vmatpush1.msra.mxu0 0.0
    %93 = vmatprep.subr.mxu0 0.0
    %94 = vmatpush1.msra.mxu0 0.0
    %95 = vmatprep.subr.mxu0 0.0
    %96 = vmatpush1.msra.mxu0 0.0
    %97 = vmatprep.subr.mxu0 0.0
    %98 = vmatpush1.msra.mxu0 0.0
    %99 = vmatprep.subr.mxu0 0.0
    %100 = vmatpush1.msra.mxu0 %v54
    %101 = vmatprep.subr.mxu0 0.0
    %102 = vmatpush1.msra.mxu0 %v53
    %103 = vmatprep.subr.mxu0 0.0
    %104 = vmatpush1.msra.mxu0 %v52
    %105 = vmatprep.subr.mxu0 0.0
    %106 = vmatpush1.msra.mxu0 %v51
    %107 = vmatprep.subr.mxu0 0.0
    %108 = vmatpush2.msra.mxu0 0.0
    %109 = vmatprep.subr.mxu0 0.0
    %110 = vmatpush2.msra.mxu0 0.0
    %111 = vmatprep.subr.mxu0 0.0
    %112 = vmatpush2.msra.mxu0 0.0
    %113 = vmatprep.subr.mxu0 0.0
    %114 = vmatpush2.msra.mxu0 0.0
    %115 = vmatprep.subr.mxu0 0.0
    %116 = vmatpush2.msra.mxu0 0.0
    %117 = vmatprep.subr.mxu0 0.0
    %118 = vmatpush2.msra.mxu0 0.0
    %119 = vmatprep.subr.mxu0 0.0
    %120 = vmatpush2.msra.mxu0 0.0
    %121 = vmatprep.subr.mxu0 0.0
    %122 = vmatpush2.msra.mxu0 0.0
    %123 = vmatprep.subr.mxu0 0.0
    %124 = vmatpush2.msra.mxu0 0.0
    %125 = vmatprep.subr.mxu0 0.0
    %126 = vmatpush2.msra.mxu0 0.0
    %127 = vmatprep.subr.mxu0 0.0
    %128 = vmatpush2.msra.mxu0 0.0
    %129 = vmatprep.subr.mxu0 0.0
    %130 = vmatpush2.msra.mxu0 0.0
    %131 = vmatprep.subr.mxu0 0.0
    %132 = vmatpush2.msra.mxu0 0.0
    %133 = vmatprep.subr.mxu0 0.0
    %134 = vmatpush2.msra.mxu0 0.0
    %135 = vmatprep.subr.mxu0 0.0
    %136 = vmatpush2.msra.mxu0 0.0
    %137 = vmatprep.subr.mxu0 0.0
    %138 = vmatpush2.msra.mxu0 0.0
    %139 = vmatprep.mubr.f32.mxu0 0.0
    %140 = vmatmul.mubr.f32.gmra.mxu0 %v73
    %v141 = vpop.f32.mrf.mxu0
    %v142 = vadd.f32 0.0, %v141
    %v143 = vpop.f32.mrf.mxu0
    %144 = vdwg.mxu0
    %v145 = vadd.f32 %v70, %v142
    %v146 = vxor.u32 %v145, 2147483648
    %v147 = vmul.f32 %v146, 1.442695
    %v148 = vpow.pop %v147
    %v149 = vadd.f32 %v148, 1.0
    %v150 = vrcp.pop %v149
    %v151 = vmul.f32 1.0, %v150
    %v152 = vtanh.pop %v145
    %v153 = vmul.f32 %v151, 0.0
    %155 = vrot.lane.b32.xlu0 %v152, 64
    %v156 = vpop.permute.xlu0 %155
    %v158 = vmul.f32 %v151, %v156
    %160 = vrot.lane.b32.xlu0 %v158, 32
    %v161 = vpop.permute.xlu0 %160
    %v163 = vadd.f32 %v153, %v161
    %v164 = vtanh.pop %v163
    %166 = vrot.lane.b32.xlu0 %v164, 64
    %v167 = vpop.permute.xlu0 %166
    %v169 = vmul.f32 %v151, %v167
    %171 = vrot.lane.b32.xlu0 %v169, 32
    %v172 = vpop.permute.xlu0 %171
    %v174 = vsel %vm71, %v172, 0.0
    %vm175 = vcmask 523264
    %v177 = vsel %vm175, %v174, 0
    %179 = vmatprep.subr.mxu0 0.0
    %180 = vmatpush1.msra.mxu0 0.0
    %181 = vmatprep.subr.mxu0 0.0
    %182 = vmatpush1.msra.mxu0 0.0
    %183 = vmatprep.subr.mxu0 0.0
    %184 = vmatpush1.msra.mxu0 0.0
    %185 = vmatprep.subr.mxu0 0.0
    %186 = vmatpush1.msra.mxu0 0.0
    %187 = vmatprep.subr.mxu0 0.0
    %188 = vmatpush1.msra.mxu0 0.0
    %189 = vmatprep.subr.mxu0 0.0
    %190 = vmatpush1.msra.mxu0 0.0
    %191 = vmatprep.subr.mxu0 0.0
    %192 = vmatpush1.msra.mxu0 0.0
    %193 = vmatprep.subr.mxu0 0.0
    %194 = vmatpush1.msra.mxu0 0.0
    %195 = vmatprep.subr.mxu0 0.0
    %196 = vmatpush1.msra.mxu0 %v62
    %197 = vmatprep.subr.mxu0 0.0
    %198 = vmatpush1.msra.mxu0 %v61
    %199 = vmatprep.subr.mxu0 0.0
    %200 = vmatpush1.msra.mxu0 %v60
    %201 = vmatprep.subr.mxu0 0.0
    %202 = vmatpush1.msra.mxu0 %v59
    %203 = vmatprep.subr.mxu0 0.0
    %204 = vmatpush1.msra.mxu0 %v58
    %205 = vmatprep.subr.mxu0 0.0
    %206 = vmatpush1.msra.mxu0 %v57
    %207 = vmatprep.subr.mxu0 0.0
    %208 = vmatpush1.msra.mxu0 %v56
    %209 = vmatprep.subr.mxu0 0.0
    %210 = vmatpush1.msra.mxu0 %v55
    %211 = vmatprep.subr.mxu0 0.0
    %212 = vmatpush2.msra.mxu0 0.0
    %213 = vmatprep.subr.mxu0 0.0
    %214 = vmatpush2.msra.mxu0 0.0
    %215 = vmatprep.subr.mxu0 0.0
    %216 = vmatpush2.msra.mxu0 0.0
    %217 = vmatprep.subr.mxu0 0.0
    %218 = vmatpush2.msra.mxu0 0.0
    %219 = vmatprep.subr.mxu0 0.0
    %220 = vmatpush2.msra.mxu0 0.0
    %221 = vmatprep.subr.mxu0 0.0
    %222 = vmatpush2.msra.mxu0 0.0
    %223 = vmatprep.subr.mxu0 0.0
    %224 = vmatpush2.msra.mxu0 0.0
    %225 = vmatprep.subr.mxu0 0.0
    %226 = vmatpush2.msra.mxu0 0.0
    %227 = vmatprep.subr.mxu0 0.0
    %228 = vmatpush2.msra.mxu0 0.0
    %229 = vmatprep.subr.mxu0 0.0
    %230 = vmatpush2.msra.mxu0 0.0
    %231 = vmatprep.subr.mxu0 0.0
    %232 = vmatpush2.msra.mxu0 0.0
    %233 = vmatprep.subr.mxu0 0.0
    %234 = vmatpush2.msra.mxu0 0.0
    %235 = vmatprep.subr.mxu0 0.0
    %236 = vmatpush2.msra.mxu0 0.0
    %237 = vmatprep.subr.mxu0 0.0
    %238 = vmatpush2.msra.mxu0 0.0
    %239 = vmatprep.subr.mxu0 0.0
    %240 = vmatpush2.msra.mxu0 0.0
    %241 = vmatprep.subr.mxu0 0.0
    %242 = vmatpush2.msra.mxu0 0.0
    %243 = vmatprep.mubr.f32.mxu0 0.0
    %244 = vmatmul.mubr.f32.gmra.mxu0 %v177
    %v245 = vpop.f32.mrf.mxu0
    %v246 = vadd.f32 %v68, %v245
    %v247 = vpop.f32.mrf.mxu0
    %248 = vdwg.mxu0
    %v249 = vxor.u32 %v246, 2147483648
    %v250 = vmul.f32 %v249, 1.442695
    %v251 = vpow.pop %v250
    %v252 = vadd.f32 %v251, 1.0
    %v253 = vrcp.pop %v252
    %v254 = vmul.f32 1.0, %v253
    %v255 = vtanh.pop %v246
    %v256 = vmul.f32 %v254, 0.0
    %258 = vrot.lane.b32.xlu0 %v255, 64
    %v259 = vpop.permute.xlu0 %258
    %v261 = vmul.f32 %v254, %v259
    %263 = vrot.lane.b32.xlu0 %v261, 32
    %v264 = vpop.permute.xlu0 %263
    %v266 = vadd.f32 %v256, %v264
    %v267 = vtanh.pop %v266
    %269 = vrot.lane.b32.xlu0 %v267, 64
    %v270 = vpop.permute.xlu0 %269
    %v272 = vmul.f32 %v254, %v270
    %s273 = scalar_lea.vmem [#allocation2], 8
    %v274 = vld [vmem:[%s273] sm:$0xff]
    %v275 = vsel %vm71, %v172, 0
    %277 = vmatprep.subr.mxu0 0.0
    %278 = vmatpush1.msra.mxu0 0.0
    %279 = vmatprep.subr.mxu0 0.0
    %280 = vmatpush1.msra.mxu0 0.0
    %281 = vmatprep.subr.mxu0 0.0
    %282 = vmatpush1.msra.mxu0 0.0
    %283 = vmatprep.subr.mxu0 0.0
    %284 = vmatpush1.msra.mxu0 0.0
    %285 = vmatprep.subr.mxu0 0.0
    %286 = vmatpush1.msra.mxu0 0.0
    %287 = vmatprep.subr.mxu0 0.0
    %288 = vmatpush1.msra.mxu0 0.0
    %289 = vmatprep.subr.mxu0 0.0
    %290 = vmatpush1.msra.mxu0 0.0
    %291 = vmatprep.subr.mxu0 0.0
    %292 = vmatpush1.msra.mxu0 0.0
    %293 = vmatprep.subr.mxu0 0.0
    %294 = vmatpush1.msra.mxu0 0.0
    %295 = vmatprep.subr.mxu0 0.0
    %296 = vmatpush1.msra.mxu0 0.0
    %297 = vmatprep.subr.mxu0 0.0
    %298 = vmatpush1.msra.mxu0 0.0
    %299 = vmatprep.subr.mxu0 0.0
    %300 = vmatpush1.msra.mxu0 0.0
    %301 = vmatprep.subr.mxu0 0.0
    %302 = vmatpush1.msra.mxu0 %v54
    %303 = vmatprep.subr.mxu0 0.0
    %304 = vmatpush1.msra.mxu0 %v53
    %305 = vmatprep.subr.mxu0 0.0
    %306 = vmatpush1.msra.mxu0 %v52
    %307 = vmatprep.subr.mxu0 0.0
    %308 = vmatpush1.msra.mxu0 %v51
    %309 = vmatprep.subr.mxu0 0.0
    %310 = vmatpush2.msra.mxu0 0.0
    %311 = vmatprep.subr.mxu0 0.0
    %312 = vmatpush2.msra.mxu0 0.0
    %313 = vmatprep.subr.mxu0 0.0
    %314 = vmatpush2.msra.mxu0 0.0
    %315 = vmatprep.subr.mxu0 0.0
    %316 = vmatpush2.msra.mxu0 0.0
    %317 = vmatprep.subr.mxu0 0.0
    %318 = vmatpush2.msra.mxu0 0.0
    %319 = vmatprep.subr.mxu0 0.0
    %320 = vmatpush2.msra.mxu0 0.0
    %321 = vmatprep.subr.mxu0 0.0
    %322 = vmatpush2.msra.mxu0 0.0
    %323 = vmatprep.subr.mxu0 0.0
    %324 = vmatpush2.msra.mxu0 0.0
    %325 = vmatprep.subr.mxu0 0.0
    %326 = vmatpush2.msra.mxu0 0.0
    %327 = vmatprep.subr.mxu0 0.0
    %328 = vmatpush2.msra.mxu0 0.0
    %329 = vmatprep.subr.mxu0 0.0
    %330 = vmatpush2.msra.mxu0 0.0
    %331 = vmatprep.subr.mxu0 0.0
    %332 = vmatpush2.msra.mxu0 0.0
    %333 = vmatprep.subr.mxu0 0.0
    %334 = vmatpush2.msra.mxu0 0.0
    %335 = vmatprep.subr.mxu0 0.0
    %336 = vmatpush2.msra.mxu0 0.0
    %337 = vmatprep.subr.mxu0 0.0
    %338 = vmatpush2.msra.mxu0 0.0
    %339 = vmatprep.subr.mxu0 0.0
    %340 = vmatpush2.msra.mxu0 0.0
    %341 = vmatprep.mubr.f32.mxu0 0.0
    %342 = vmatmul.mubr.f32.gmra.mxu0 %v275
    %v343 = vpop.f32.mrf.mxu0
    %v344 = vadd.f32 0.0, %v343
    %v345 = vpop.f32.mrf.mxu0
    %346 = vdwg.mxu0
    %v347 = vadd.f32 %v274, %v344
    %v348 = vxor.u32 %v347, 2147483648
    %v349 = vmul.f32 %v348, 1.442695
    %v350 = vpow.pop %v349
    %v351 = vadd.f32 %v350, 1.0
    %v352 = vrcp.pop %v351
    %v353 = vmul.f32 1.0, %v352
    %v354 = vtanh.pop %v347
    %v355 = vmul.f32 %v353, %v163
    %357 = vrot.lane.b32.xlu0 %v354, 64
    %v358 = vpop.permute.xlu0 %357
    %v360 = vmul.f32 %v353, %v358
    %362 = vrot.lane.b32.xlu0 %v360, 32
    %v363 = vpop.permute.xlu0 %362
    %v365 = vadd.f32 %v355, %v363
    %v366 = vtanh.pop %v365
    %368 = vrot.lane.b32.xlu0 %v366, 64
    %v369 = vpop.permute.xlu0 %368
    %v371 = vmul.f32 %v353, %v369
    %373 = vrot.lane.b32.xlu0 %v371, 32
    %v374 = vpop.permute.xlu0 %373
    %377 = vrot.lane.b32.xlu0 %v272, 64
    %v378 = vpop.permute.xlu0 %377
    %v380 = vsel %vm71, %v374, %v378
    %v382 = vsel %vm175, %v380, 0
    %384 = vmatprep.subr.mxu0 0.0
    %385 = vmatpush1.msra.mxu0 0.0
    %386 = vmatprep.subr.mxu0 0.0
    %387 = vmatpush1.msra.mxu0 0.0
    %388 = vmatprep.subr.mxu0 0.0
    %389 = vmatpush1.msra.mxu0 0.0
    %390 = vmatprep.subr.mxu0 0.0
    %391 = vmatpush1.msra.mxu0 0.0
    %392 = vmatprep.subr.mxu0 0.0
    %393 = vmatpush1.msra.mxu0 0.0
    %394 = vmatprep.subr.mxu0 0.0
    %395 = vmatpush1.msra.mxu0 0.0
    %396 = vmatprep.subr.mxu0 0.0
    %397 = vmatpush1.msra.mxu0 0.0
    %398 = vmatprep.subr.mxu0 0.0
    %399 = vmatpush1.msra.mxu0 0.0
    %400 = vmatprep.subr.mxu0 0.0
    %401 = vmatpush1.msra.mxu0 %v62
    %402 = vmatprep.subr.mxu0 0.0
    %403 = vmatpush1.msra.mxu0 %v61
    %404 = vmatprep.subr.mxu0 0.0
    %405 = vmatpush1.msra.mxu0 %v60
    %406 = vmatprep.subr.mxu0 0.0
    %407 = vmatpush1.msra.mxu0 %v59
    %408 = vmatprep.subr.mxu0 0.0
    %409 = vmatpush1.msra.mxu0 %v58
    %410 = vmatprep.subr.mxu0 0.0
    %411 = vmatpush1.msra.mxu0 %v57
    %412 = vmatprep.subr.mxu0 0.0
    %413 = vmatpush1.msra.mxu0 %v56
    %414 = vmatprep.subr.mxu0 0.0
    %415 = vmatpush1.msra.mxu0 %v55
    %416 = vmatprep.subr.mxu0 0.0
    %417 = vmatpush2.msra.mxu0 0.0
    %418 = vmatprep.subr.mxu0 0.0
    %419 = vmatpush2.msra.mxu0 0.0
    %420 = vmatprep.subr.mxu0 0.0
    %421 = vmatpush2.msra.mxu0 0.0
    %422 = vmatprep.subr.mxu0 0.0
    %423 = vmatpush2.msra.mxu0 0.0
    %424 = vmatprep.subr.mxu0 0.0
    %425 = vmatpush2.msra.mxu0 0.0
    %426 = vmatprep.subr.mxu0 0.0
    %427 = vmatpush2.msra.mxu0 0.0
    %428 = vmatprep.subr.mxu0 0.0
    %429 = vmatpush2.msra.mxu0 0.0
    %430 = vmatprep.subr.mxu0 0.0
    %431 = vmatpush2.msra.mxu0 0.0
    %432 = vmatprep.subr.mxu0 0.0
    %433 = vmatpush2.msra.mxu0 0.0
    %434 = vmatprep.subr.mxu0 0.0
    %435 = vmatpush2.msra.mxu0 0.0
    %436 = vmatprep.subr.mxu0 0.0
    %437 = vmatpush2.msra.mxu0 0.0
    %438 = vmatprep.subr.mxu0 0.0
    %439 = vmatpush2.msra.mxu0 0.0
    %440 = vmatprep.subr.mxu0 0.0
    %441 = vmatpush2.msra.mxu0 0.0
    %442 = vmatprep.subr.mxu0 0.0
    %443 = vmatpush2.msra.mxu0 0.0
    %444 = vmatprep.subr.mxu0 0.0
    %445 = vmatpush2.msra.mxu0 0.0
    %446 = vmatprep.subr.mxu0 0.0
    %447 = vmatpush2.msra.mxu0 0.0
    %448 = vmatprep.mubr.f32.mxu0 0.0
    %449 = vmatmul.mubr.f32.gmra.mxu0 %v382
    %v450 = vpop.f32.mrf.mxu0
    %v451 = vadd.f32 %v68, %v450
    %v452 = vpop.f32.mrf.mxu0
    %453 = vdwg.mxu0
    %v454 = vxor.u32 %v451, 2147483648
    %v455 = vmul.f32 %v454, 1.442695
    %v456 = vpow.pop %v455
    %v457 = vadd.f32 %v456, 1.0
    %v458 = vrcp.pop %v457
    %v459 = vmul.f32 1.0, %v458
    %v460 = vtanh.pop %v451
    %v461 = vmul.f32 %v459, %v266
    %463 = vrot.lane.b32.xlu0 %v460, 64
    %v464 = vpop.permute.xlu0 %463
    %v466 = vmul.f32 %v459, %v464
    %468 = vrot.lane.b32.xlu0 %v466, 32
    %v469 = vpop.permute.xlu0 %468
    %v471 = vadd.f32 %v461, %v469
    %v472 = vtanh.pop %v471
    %474 = vrot.lane.b32.xlu0 %v472, 64
    %v475 = vpop.permute.xlu0 %474
    %v477 = vmul.f32 %v459, %v475
    %s478 = scalar_lea.vmem [#allocation2], 16
    %v479 = vld [vmem:[%s478] sm:$0xff]
    %v480 = vsel %vm71, %v374, 0
    %482 = vmatprep.subr.mxu0 0.0
    %483 = vmatpush1.msra.mxu0 0.0
    %484 = vmatprep.subr.mxu0 0.0
    %485 = vmatpush1.msra.mxu0 0.0
    %486 = vmatprep.subr.mxu0 0.0
    %487 = vmatpush1.msra.mxu0 0.0
    %488 = vmatprep.subr.mxu0 0.0
    %489 = vmatpush1.msra.mxu0 0.0
    %490 = vmatprep.subr.mxu0 0.0
    %491 = vmatpush1.msra.mxu0 0.0
    %492 = vmatprep.subr.mxu0 0.0
    %493 = vmatpush1.msra.mxu0 0.0
    %494 = vmatprep.subr.mxu0 0.0
    %495 = vmatpush1.msra.mxu0 0.0
    %496 = vmatprep.subr.mxu0 0.0
    %497 = vmatpush1.msra.mxu0 0.0
    %498 = vmatprep.subr.mxu0 0.0
    %499 = vmatpush1.msra.mxu0 0.0
    %500 = vmatprep.subr.mxu0 0.0
    %501 = vmatpush1.msra.mxu0 0.0
    %502 = vmatprep.subr.mxu0 0.0
    %503 = vmatpush1.msra.mxu0 0.0
    %504 = vmatprep.subr.mxu0 0.0
    %505 = vmatpush1.msra.mxu0 0.0
    %506 = vmatprep.subr.mxu0 0.0
    %507 = vmatpush1.msra.mxu0 %v54
    %508 = vmatprep.subr.mxu0 0.0
    %509 = vmatpush1.msra.mxu0 %v53
    %510 = vmatprep.subr.mxu0 0.0
    %511 = vmatpush1.msra.mxu0 %v52
    %512 = vmatprep.subr.mxu0 0.0
    %513 = vmatpush1.msra.mxu0 %v51
    %514 = vmatprep.subr.mxu0 0.0
    %515 = vmatpush2.msra.mxu0 0.0
    %516 = vmatprep.subr.mxu0 0.0
    %517 = vmatpush2.msra.mxu0 0.0
    %518 = vmatprep.subr.mxu0 0.0
    %519 = vmatpush2.msra.mxu0 0.0
    %520 = vmatprep.subr.mxu0 0.0
    %521 = vmatpush2.msra.mxu0 0.0
    %522 = vmatprep.subr.mxu0 0.0
    %523 = vmatpush2.msra.mxu0 0.0
    %524 = vmatprep.subr.mxu0 0.0
    %525 = vmatpush2.msra.mxu0 0.0
    %526 = vmatprep.subr.mxu0 0.0
    %527 = vmatpush2.msra.mxu0 0.0
    %528 = vmatprep.subr.mxu0 0.0
    %529 = vmatpush2.msra.mxu0 0.0
    %530 = vmatprep.subr.mxu0 0.0
    %531 = vmatpush2.msra.mxu0 0.0
    %532 = vmatprep.subr.mxu0 0.0
    %533 = vmatpush2.msra.mxu0 0.0
    %534 = vmatprep.subr.mxu0 0.0
    %535 = vmatpush2.msra.mxu0 0.0
    %536 = vmatprep.subr.mxu0 0.0
    %537 = vmatpush2.msra.mxu0 0.0
    %538 = vmatprep.subr.mxu0 0.0
    %539 = vmatpush2.msra.mxu0 0.0
    %540 = vmatprep.subr.mxu0 0.0
    %541 = vmatpush2.msra.mxu0 0.0
    %542 = vmatprep.subr.mxu0 0.0
    %543 = vmatpush2.msra.mxu0 0.0
    %544 = vmatprep.subr.mxu0 0.0
    %545 = vmatpush2.msra.mxu0 0.0
    %546 = vmatprep.mubr.f32.mxu0 0.0
    %547 = vmatmul.mubr.f32.gmra.mxu0 %v480
    %v548 = vpop.f32.mrf.mxu0
    %v549 = vadd.f32 0.0, %v548
    %v550 = vpop.f32.mrf.mxu0
    %551 = vdwg.mxu0
    %v552 = vadd.f32 %v479, %v549
    %v553 = vxor.u32 %v552, 2147483648
    %v554 = vmul.f32 %v553, 1.442695
    %v555 = vpow.pop %v554
    %v556 = vadd.f32 %v555, 1.0
    %v557 = vrcp.pop %v556
    %v558 = vmul.f32 1.0, %v557
    %v559 = vtanh.pop %v552
    %v560 = vmul.f32 %v558, %v365
    %562 = vrot.lane.b32.xlu0 %v559, 64
    %v563 = vpop.permute.xlu0 %562
    %v565 = vmul.f32 %v558, %v563
    %567 = vrot.lane.b32.xlu0 %v565, 32
    %v568 = vpop.permute.xlu0 %567
    %v570 = vadd.f32 %v560, %v568
    %v571 = vtanh.pop %v570
    %573 = vrot.lane.b32.xlu0 %v571, 64
    %v574 = vpop.permute.xlu0 %573
    %v576 = vmul.f32 %v558, %v574
    %578 = vrot.lane.b32.xlu0 %v576, 32
    %v579 = vpop.permute.xlu0 %578
    %582 = vrot.lane.b32.xlu0 %v477, 64
    %v583 = vpop.permute.xlu0 %582
    %v585 = vsel %vm71, %v579, %v583
    %v587 = vsel %vm175, %v585, 0
    %589 = vmatprep.subr.mxu0 0.0
    %590 = vmatpush1.msra.mxu0 0.0
    %591 = vmatprep.subr.mxu0 0.0
    %592 = vmatpush1.msra.mxu0 0.0
    %593 = vmatprep.subr.mxu0 0.0
    %594 = vmatpush1.msra.mxu0 0.0
    %595 = vmatprep.subr.mxu0 0.0
    %596 = vmatpush1.msra.mxu0 0.0
    %597 = vmatprep.subr.mxu0 0.0
    %598 = vmatpush1.msra.mxu0 0.0
    %599 = vmatprep.subr.mxu0 0.0
    %600 = vmatpush1.msra.mxu0 0.0
    %601 = vmatprep.subr.mxu0 0.0
    %602 = vmatpush1.msra.mxu0 0.0
    %603 = vmatprep.subr.mxu0 0.0
    %604 = vmatpush1.msra.mxu0 0.0
    %605 = vmatprep.subr.mxu0 0.0
    %606 = vmatpush1.msra.mxu0 %v62
    %607 = vmatprep.subr.mxu0 0.0
    %608 = vmatpush1.msra.mxu0 %v61
    %609 = vmatprep.subr.mxu0 0.0
    %610 = vmatpush1.msra.mxu0 %v60
    %611 = vmatprep.subr.mxu0 0.0
    %612 = vmatpush1.msra.mxu0 %v59
    %613 = vmatprep.subr.mxu0 0.0
    %614 = vmatpush1.msra.mxu0 %v58
    %615 = vmatprep.subr.mxu0 0.0
    %616 = vmatpush1.msra.mxu0 %v57
    %617 = vmatprep.subr.mxu0 0.0
    %618 = vmatpush1.msra.mxu0 %v56
    %619 = vmatprep.subr.mxu0 0.0
    %620 = vmatpush1.msra.mxu0 %v55
    %621 = vmatprep.subr.mxu0 0.0
    %622 = vmatpush2.msra.mxu0 0.0
    %623 = vmatprep.subr.mxu0 0.0
    %624 = vmatpush2.msra.mxu0 0.0
    %625 = vmatprep.subr.mxu0 0.0
    %626 = vmatpush2.msra.mxu0 0.0
    %627 = vmatprep.subr.mxu0 0.0
    %628 = vmatpush2.msra.mxu0 0.0
    %629 = vmatprep.subr.mxu0 0.0
    %630 = vmatpush2.msra.mxu0 0.0
    %631 = vmatprep.subr.mxu0 0.0
    %632 = vmatpush2.msra.mxu0 0.0
    %633 = vmatprep.subr.mxu0 0.0
    %634 = vmatpush2.msra.mxu0 0.0
    %635 = vmatprep.subr.mxu0 0.0
    %636 = vmatpush2.msra.mxu0 0.0
    %637 = vmatprep.subr.mxu0 0.0
    %638 = vmatpush2.msra.mxu0 0.0
    %639 = vmatprep.subr.mxu0 0.0
    %640 = vmatpush2.msra.mxu0 0.0
    %641 = vmatprep.subr.mxu0 0.0
    %642 = vmatpush2.msra.mxu0 0.0
    %643 = vmatprep.subr.mxu0 0.0
    %644 = vmatpush2.msra.mxu0 0.0
    %645 = vmatprep.subr.mxu0 0.0
    %646 = vmatpush2.msra.mxu0 0.0
    %647 = vmatprep.subr.mxu0 0.0
    %648 = vmatpush2.msra.mxu0 0.0
    %649 = vmatprep.subr.mxu0 0.0
    %650 = vmatpush2.msra.mxu0 0.0
    %651 = vmatprep.subr.mxu0 0.0
    %652 = vmatpush2.msra.mxu0 0.0
    %653 = vmatprep.mubr.f32.mxu0 0.0
    %654 = vmatmul.mubr.f32.gmra.mxu0 %v587
    %v655 = vpop.f32.mrf.mxu0
    %v656 = vadd.f32 %v68, %v655
    %v657 = vpop.f32.mrf.mxu0
    %658 = vdwg.mxu0
    %v659 = vxor.u32 %v656, 2147483648
    %v660 = vmul.f32 %v659, 1.442695
    %v661 = vpow.pop %v660
    %v662 = vadd.f32 %v661, 1.0
    %v663 = vrcp.pop %v662
    %v664 = vmul.f32 1.0, %v663
    %v665 = vtanh.pop %v656
    %v666 = vmul.f32 %v664, %v471
    %668 = vrot.lane.b32.xlu0 %v665, 64
    %v669 = vpop.permute.xlu0 %668
    %v671 = vmul.f32 %v664, %v669
    %673 = vrot.lane.b32.xlu0 %v671, 32
    %v674 = vpop.permute.xlu0 %673
    %v676 = vadd.f32 %v666, %v674
    %v677 = vtanh.pop %v676
    %679 = vrot.lane.b32.xlu0 %v677, 64
    %v680 = vpop.permute.xlu0 %679
    %v682 = vmul.f32 %v664, %v680
    %s683 = scalar_lea.vmem [#allocation2], 24
    %v684 = vld [vmem:[%s683] sm:$0xff]
    %v685 = vsel %vm71, %v579, 0
    %687 = vmatprep.subr.mxu0 0.0
    %688 = vmatpush1.msra.mxu0 0.0
    %689 = vmatprep.subr.mxu0 0.0
    %690 = vmatpush1.msra.mxu0 0.0
    %691 = vmatprep.subr.mxu0 0.0
    %692 = vmatpush1.msra.mxu0 0.0
    %693 = vmatprep.subr.mxu0 0.0
    %694 = vmatpush1.msra.mxu0 0.0
    %695 = vmatprep.subr.mxu0 0.0
    %696 = vmatpush1.msra.mxu0 0.0
    %697 = vmatprep.subr.mxu0 0.0
    %698 = vmatpush1.msra.mxu0 0.0
    %699 = vmatprep.subr.mxu0 0.0
    %700 = vmatpush1.msra.mxu0 0.0
    %701 = vmatprep.subr.mxu0 0.0
    %702 = vmatpush1.msra.mxu0 0.0
    %703 = vmatprep.subr.mxu0 0.0
    %704 = vmatpush1.msra.mxu0 0.0
    %705 = vmatprep.subr.mxu0 0.0
    %706 = vmatpush1.msra.mxu0 0.0
    %707 = vmatprep.subr.mxu0 0.0
    %708 = vmatpush1.msra.mxu0 0.0
    %709 = vmatprep.subr.mxu0 0.0
    %710 = vmatpush1.msra.mxu0 0.0
    %711 = vmatprep.subr.mxu0 0.0
    %712 = vmatpush1.msra.mxu0 %v54
    %713 = vmatprep.subr.mxu0 0.0
    %714 = vmatpush1.msra.mxu0 %v53
    %715 = vmatprep.subr.mxu0 0.0
    %716 = vmatpush1.msra.mxu0 %v52
    %717 = vmatprep.subr.mxu0 0.0
    %718 = vmatpush1.msra.mxu0 %v51
    %719 = vmatprep.subr.mxu0 0.0
    %720 = vmatpush2.msra.mxu0 0.0
    %721 = vmatprep.subr.mxu0 0.0
    %722 = vmatpush2.msra.mxu0 0.0
    %723 = vmatprep.subr.mxu0 0.0
    %724 = vmatpush2.msra.mxu0 0.0
    %725 = vmatprep.subr.mxu0 0.0
    %726 = vmatpush2.msra.mxu0 0.0
    %727 = vmatprep.subr.mxu0 0.0
    %728 = vmatpush2.msra.mxu0 0.0
    %729 = vmatprep.subr.mxu0 0.0
    %730 = vmatpush2.msra.mxu0 0.0
    %731 = vmatprep.subr.mxu0 0.0
    %732 = vmatpush2.msra.mxu0 0.0
    %733 = vmatprep.subr.mxu0 0.0
    %734 = vmatpush2.msra.mxu0 0.0
    %735 = vmatprep.subr.mxu0 0.0
    %736 = vmatpush2.msra.mxu0 0.0
    %737 = vmatprep.subr.mxu0 0.0
    %738 = vmatpush2.msra.mxu0 0.0
    %739 = vmatprep.subr.mxu0 0.0
    %740 = vmatpush2.msra.mxu0 0.0
    %741 = vmatprep.subr.mxu0 0.0
    %742 = vmatpush2.msra.mxu0 0.0
    %743 = vmatprep.subr.mxu0 0.0
    %744 = vmatpush2.msra.mxu0 0.0
    %745 = vmatprep.subr.mxu0 0.0
    %746 = vmatpush2.msra.mxu0 0.0
    %747 = vmatprep.subr.mxu0 0.0
    %748 = vmatpush2.msra.mxu0 0.0
    %749 = vmatprep.subr.mxu0 0.0
    %750 = vmatpush2.msra.mxu0 0.0
    %751 = vmatprep.mubr.f32.mxu0 0.0
    %752 = vmatmul.mubr.f32.gmra.mxu0 %v685
    %v753 = vpop.f32.mrf.mxu0
    %v754 = vadd.f32 0.0, %v753
    %v755 = vpop.f32.mrf.mxu0
    %756 = vdwg.mxu0
    %v757 = vadd.f32 %v684, %v754
    %v758 = vxor.u32 %v757, 2147483648
    %v759 = vmul.f32 %v758, 1.442695
    %v760 = vpow.pop %v759
    %v761 = vadd.f32 %v760, 1.0
    %v762 = vrcp.pop %v761
    %v763 = vmul.f32 1.0, %v762
    %v764 = vtanh.pop %v757
    %v765 = vmul.f32 %v763, %v570
    %767 = vrot.lane.b32.xlu0 %v764, 64
    %v768 = vpop.permute.xlu0 %767
    %v770 = vmul.f32 %v763, %v768
    %772 = vrot.lane.b32.xlu0 %v770, 32
    %v773 = vpop.permute.xlu0 %772
    %v775 = vadd.f32 %v765, %v773
    %v776 = vtanh.pop %v775
    %778 = vrot.lane.b32.xlu0 %v776, 64
    %v779 = vpop.permute.xlu0 %778
    %v781 = vmul.f32 %v763, %v779
    %783 = vrot.lane.b32.xlu0 %v781, 32
    %v784 = vpop.permute.xlu0 %783
    %787 = vrot.lane.b32.xlu0 %v682, 64
    %v788 = vpop.permute.xlu0 %787
    %v790 = vsel %vm71, %v784, %v788
    %v792 = vsel %vm175, %v790, 0
    %794 = vmatprep.subr.mxu0 0.0
    %795 = vmatpush1.msra.mxu0 0.0
    %796 = vmatprep.subr.mxu0 0.0
    %797 = vmatpush1.msra.mxu0 0.0
    %798 = vmatprep.subr.mxu0 0.0
    %799 = vmatpush1.msra.mxu0 0.0
    %800 = vmatprep.subr.mxu0 0.0
    %801 = vmatpush1.msra.mxu0 0.0
    %802 = vmatprep.subr.mxu0 0.0
    %803 = vmatpush1.msra.mxu0 0.0
    %804 = vmatprep.subr.mxu0 0.0
    %805 = vmatpush1.msra.mxu0 0.0
    %806 = vmatprep.subr.mxu0 0.0
    %807 = vmatpush1.msra.mxu0 0.0
    %808 = vmatprep.subr.mxu0 0.0
    %809 = vmatpush1.msra.mxu0 0.0
    %810 = vmatprep.subr.mxu0 0.0
    %811 = vmatpush1.msra.mxu0 %v62
    %812 = vmatprep.subr.mxu0 0.0
    %813 = vmatpush1.msra.mxu0 %v61
    %814 = vmatprep.subr.mxu0 0.0
    %815 = vmatpush1.msra.mxu0 %v60
    %816 = vmatprep.subr.mxu0 0.0
    %817 = vmatpush1.msra.mxu0 %v59
    %818 = vmatprep.subr.mxu0 0.0
    %819 = vmatpush1.msra.mxu0 %v58
    %820 = vmatprep.subr.mxu0 0.0
    %821 = vmatpush1.msra.mxu0 %v57
    %822 = vmatprep.subr.mxu0 0.0
    %823 = vmatpush1.msra.mxu0 %v56
    %824 = vmatprep.subr.mxu0 0.0
    %825 = vmatpush1.msra.mxu0 %v55
    %826 = vmatprep.subr.mxu0 0.0
    %827 = vmatpush2.msra.mxu0 0.0
    %828 = vmatprep.subr.mxu0 0.0
    %829 = vmatpush2.msra.mxu0 0.0
    %830 = vmatprep.subr.mxu0 0.0
    %831 = vmatpush2.msra.mxu0 0.0
    %832 = vmatprep.subr.mxu0 0.0
    %833 = vmatpush2.msra.mxu0 0.0
    %834 = vmatprep.subr.mxu0 0.0
    %835 = vmatpush2.msra.mxu0 0.0
    %836 = vmatprep.subr.mxu0 0.0
    %837 = vmatpush2.msra.mxu0 0.0
    %838 = vmatprep.subr.mxu0 0.0
    %839 = vmatpush2.msra.mxu0 0.0
    %840 = vmatprep.subr.mxu0 0.0
    %841 = vmatpush2.msra.mxu0 0.0
    %842 = vmatprep.subr.mxu0 0.0
    %843 = vmatpush2.msra.mxu0 0.0
    %844 = vmatprep.subr.mxu0 0.0
    %845 = vmatpush2.msra.mxu0 0.0
    %846 = vmatprep.subr.mxu0 0.0
    %847 = vmatpush2.msra.mxu0 0.0
    %848 = vmatprep.subr.mxu0 0.0
    %849 = vmatpush2.msra.mxu0 0.0
    %850 = vmatprep.subr.mxu0 0.0
    %851 = vmatpush2.msra.mxu0 0.0
    %852 = vmatprep.subr.mxu0 0.0
    %853 = vmatpush2.msra.mxu0 0.0
    %854 = vmatprep.subr.mxu0 0.0
    %855 = vmatpush2.msra.mxu0 0.0
    %856 = vmatprep.subr.mxu0 0.0
    %857 = vmatpush2.msra.mxu0 0.0
    %858 = vmatprep.mubr.f32.mxu0 0.0
    %859 = vmatmul.mubr.f32.gmra.mxu0 %v792
    %v860 = vpop.f32.mrf.mxu0
    %v861 = vadd.f32 %v68, %v860
    %v862 = vpop.f32.mrf.mxu0
    %863 = vdwg.mxu0
    %v864 = vxor.u32 %v861, 2147483648
    %v865 = vmul.f32 %v864, 1.442695
    %v866 = vpow.pop %v865
    %v867 = vadd.f32 %v866, 1.0
    %v868 = vrcp.pop %v867
    %v869 = vmul.f32 1.0, %v868
    %v870 = vtanh.pop %v861
    %v871 = vmul.f32 %v869, %v676
    %873 = vrot.lane.b32.xlu0 %v870, 64
    %v874 = vpop.permute.xlu0 %873
    %v876 = vmul.f32 %v869, %v874
    %878 = vrot.lane.b32.xlu0 %v876, 32
    %v879 = vpop.permute.xlu0 %878
    %v881 = vadd.f32 %v871, %v879
    %v882 = vtanh.pop %v881
    %884 = vrot.lane.b32.xlu0 %v882, 64
    %v885 = vpop.permute.xlu0 %884
    %v887 = vmul.f32 %v869, %v885
    %s888 = scalar_lea.vmem [#allocation2], 32
    %v889 = vld [vmem:[%s888] sm:$0xff]
    %v890 = vsel %vm71, %v784, 0
    %892 = vmatprep.subr.mxu0 0.0
    %893 = vmatpush1.msra.mxu0 0.0
    %894 = vmatprep.subr.mxu0 0.0
    %895 = vmatpush1.msra.mxu0 0.0
    %896 = vmatprep.subr.mxu0 0.0
    %897 = vmatpush1.msra.mxu0 0.0
    %898 = vmatprep.subr.mxu0 0.0
    %899 = vmatpush1.msra.mxu0 0.0
    %900 = vmatprep.subr.mxu0 0.0
    %901 = vmatpush1.msra.mxu0 0.0
    %902 = vmatprep.subr.mxu0 0.0
    %903 = vmatpush1.msra.mxu0 0.0
    %904 = vmatprep.subr.mxu0 0.0
    %905 = vmatpush1.msra.mxu0 0.0
    %906 = vmatprep.subr.mxu0 0.0
    %907 = vmatpush1.msra.mxu0 0.0
    %908 = vmatprep.subr.mxu0 0.0
    %909 = vmatpush1.msra.mxu0 0.0
    %910 = vmatprep.subr.mxu0 0.0
    %911 = vmatpush1.msra.mxu0 0.0
    %912 = vmatprep.subr.mxu0 0.0
    %913 = vmatpush1.msra.mxu0 0.0
    %914 = vmatprep.subr.mxu0 0.0
    %915 = vmatpush1.msra.mxu0 0.0
    %916 = vmatprep.subr.mxu0 0.0
    %917 = vmatpush1.msra.mxu0 %v54
    %918 = vmatprep.subr.mxu0 0.0
    %919 = vmatpush1.msra.mxu0 %v53
    %920 = vmatprep.subr.mxu0 0.0
    %921 = vmatpush1.msra.mxu0 %v52
    %922 = vmatprep.subr.mxu0 0.0
    %923 = vmatpush1.msra.mxu0 %v51
    %924 = vmatprep.subr.mxu0 0.0
    %925 = vmatpush2.msra.mxu0 0.0
    %926 = vmatprep.subr.mxu0 0.0
    %927 = vmatpush2.msra.mxu0 0.0
    %928 = vmatprep.subr.mxu0 0.0
    %929 = vmatpush2.msra.mxu0 0.0
    %930 = vmatprep.subr.mxu0 0.0
    %931 = vmatpush2.msra.mxu0 0.0
    %932 = vmatprep.subr.mxu0 0.0
    %933 = vmatpush2.msra.mxu0 0.0
    %934 = vmatprep.subr.mxu0 0.0
    %935 = vmatpush2.msra.mxu0 0.0
    %936 = vmatprep.subr.mxu0 0.0
    %937 = vmatpush2.msra.mxu0 0.0
    %938 = vmatprep.subr.mxu0 0.0
    %939 = vmatpush2.msra.mxu0 0.0
    %940 = vmatprep.subr.mxu0 0.0
    %941 = vmatpush2.msra.mxu0 0.0
    %942 = vmatprep.subr.mxu0 0.0
    %943 = vmatpush2.msra.mxu0 0.0
    %944 = vmatprep.subr.mxu0 0.0
    %945 = vmatpush2.msra.mxu0 0.0
    %946 = vmatprep.subr.mxu0 0.0
    %947 = vmatpush2.msra.mxu0 0.0
    %948 = vmatprep.subr.mxu0 0.0
    %949 = vmatpush2.msra.mxu0 0.0
    %950 = vmatprep.subr.mxu0 0.0
    %951 = vmatpush2.msra.mxu0 0.0
    %952 = vmatprep.subr.mxu0 0.0
    %953 = vmatpush2.msra.mxu0 0.0
    %954 = vmatprep.subr.mxu0 0.0
    %955 = vmatpush2.msra.mxu0 0.0
    %956 = vmatprep.mubr.f32.mxu0 0.0
    %957 = vmatmul.mubr.f32.gmra.mxu0 %v890
    %v958 = vpop.f32.mrf.mxu0
    %v959 = vadd.f32 0.0, %v958
    %v960 = vpop.f32.mrf.mxu0
    %961 = vdwg.mxu0
    %v962 = vadd.f32 %v889, %v959
    %v963 = vxor.u32 %v962, 2147483648
    %v964 = vmul.f32 %v963, 1.442695
    %v965 = vpow.pop %v964
    %v966 = vadd.f32 %v965, 1.0
    %v967 = vrcp.pop %v966
    %v968 = vmul.f32 1.0, %v967
    %v969 = vtanh.pop %v962
    %v970 = vmul.f32 %v968, %v775
    %972 = vrot.lane.b32.xlu0 %v969, 64
    %v973 = vpop.permute.xlu0 %972
    %v975 = vmul.f32 %v968, %v973
    %977 = vrot.lane.b32.xlu0 %v975, 32
    %v978 = vpop.permute.xlu0 %977
    %v980 = vadd.f32 %v970, %v978
    %v981 = vtanh.pop %v980
    %983 = vrot.lane.b32.xlu0 %v981, 64
    %v984 = vpop.permute.xlu0 %983
    %v986 = vmul.f32 %v968, %v984
    %988 = vrot.lane.b32.xlu0 %v986, 32
    %v989 = vpop.permute.xlu0 %988
    %992 = vrot.lane.b32.xlu0 %v887, 64
    %v993 = vpop.permute.xlu0 %992
    %v995 = vsel %vm71, %v989, %v993
    %v997 = vsel %vm175, %v995, 0
    %999 = vmatprep.subr.mxu0 0.0
    %1000 = vmatpush1.msra.mxu0 0.0
    %1001 = vmatprep.subr.mxu0 0.0
    %1002 = vmatpush1.msra.mxu0 0.0
    %1003 = vmatprep.subr.mxu0 0.0
    %1004 = vmatpush1.msra.mxu0 0.0
    %1005 = vmatprep.subr.mxu0 0.0
    %1006 = vmatpush1.msra.mxu0 0.0
    %1007 = vmatprep.subr.mxu0 0.0
    %1008 = vmatpush1.msra.mxu0 0.0
    %1009 = vmatprep.subr.mxu0 0.0
    %1010 = vmatpush1.msra.mxu0 0.0
    %1011 = vmatprep.subr.mxu0 0.0
    %1012 = vmatpush1.msra.mxu0 0.0
    %1013 = vmatprep.subr.mxu0 0.0
    %1014 = vmatpush1.msra.mxu0 0.0
    %1015 = vmatprep.subr.mxu0 0.0
    %1016 = vmatpush1.msra.mxu0 %v62
    %1017 = vmatprep.subr.mxu0 0.0
    %1018 = vmatpush1.msra.mxu0 %v61
    %1019 = vmatprep.subr.mxu0 0.0
    %1020 = vmatpush1.msra.mxu0 %v60
    %1021 = vmatprep.subr.mxu0 0.0
    %1022 = vmatpush1.msra.mxu0 %v59
    %1023 = vmatprep.subr.mxu0 0.0
    %1024 = vmatpush1.msra.mxu0 %v58
    %1025 = vmatprep.subr.mxu0 0.0
    %1026 = vmatpush1.msra.mxu0 %v57
    %1027 = vmatprep.subr.mxu0 0.0
    %1028 = vmatpush1.msra.mxu0 %v56
    %1029 = vmatprep.subr.mxu0 0.0
    %1030 = vmatpush1.msra.mxu0 %v55
    %1031 = vmatprep.subr.mxu0 0.0
    %1032 = vmatpush2.msra.mxu0 0.0
    %1033 = vmatprep.subr.mxu0 0.0
    %1034 = vmatpush2.msra.mxu0 0.0
    %1035 = vmatprep.subr.mxu0 0.0
    %1036 = vmatpush2.msra.mxu0 0.0
    %1037 = vmatprep.subr.mxu0 0.0
    %1038 = vmatpush2.msra.mxu0 0.0
    %1039 = vmatprep.subr.mxu0 0.0
    %1040 = vmatpush2.msra.mxu0 0.0
    %1041 = vmatprep.subr.mxu0 0.0
    %1042 = vmatpush2.msra.mxu0 0.0
    %1043 = vmatprep.subr.mxu0 0.0
    %1044 = vmatpush2.msra.mxu0 0.0
    %1045 = vmatprep.subr.mxu0 0.0
    %1046 = vmatpush2.msra.mxu0 0.0
    %1047 = vmatprep.subr.mxu0 0.0
    %1048 = vmatpush2.msra.mxu0 0.0
    %1049 = vmatprep.subr.mxu0 0.0
    %1050 = vmatpush2.msra.mxu0 0.0
    %1051 = vmatprep.subr.mxu0 0.0
    %1052 = vmatpush2.msra.mxu0 0.0
    %1053 = vmatprep.subr.mxu0 0.0
    %1054 = vmatpush2.msra.mxu0 0.0
    %1055 = vmatprep.subr.mxu0 0.0
    %1056 = vmatpush2.msra.mxu0 0.0
    %1057 = vmatprep.subr.mxu0 0.0
    %1058 = vmatpush2.msra.mxu0 0.0
    %1059 = vmatprep.subr.mxu0 0.0
    %1060 = vmatpush2.msra.mxu0 0.0
    %1061 = vmatprep.subr.mxu0 0.0
    %1062 = vmatpush2.msra.mxu0 0.0
    %1063 = vmatprep.mubr.f32.mxu0 0.0
    %1064 = vmatmul.mubr.f32.gmra.mxu0 %v997
    %v1065 = vpop.f32.mrf.mxu0
    %v1066 = vadd.f32 %v68, %v1065
    %v1067 = vpop.f32.mrf.mxu0
    %1068 = vdwg.mxu0
    %v1069 = vxor.u32 %v1066, 2147483648
    %v1070 = vmul.f32 %v1069, 1.442695
    %v1071 = vpow.pop %v1070
    %v1072 = vadd.f32 %v1071, 1.0
    %v1073 = vrcp.pop %v1072
    %v1074 = vmul.f32 1.0, %v1073
    %v1075 = vtanh.pop %v1066
    %v1076 = vmul.f32 %v1074, %v881
    %1078 = vrot.lane.b32.xlu0 %v1075, 64
    %v1079 = vpop.permute.xlu0 %1078
    %v1081 = vmul.f32 %v1074, %v1079
    %1083 = vrot.lane.b32.xlu0 %v1081, 32
    %v1084 = vpop.permute.xlu0 %1083
    %v1086 = vadd.f32 %v1076, %v1084
    %v1087 = vtanh.pop %v1086
    %1089 = vrot.lane.b32.xlu0 %v1087, 64
    %v1090 = vpop.permute.xlu0 %1089
    %v1092 = vmul.f32 %v1074, %v1090
    %s1093 = scalar_lea.vmem [#allocation2], 40
    %v1094 = vld [vmem:[%s1093] sm:$0xff]
    %v1095 = vsel %vm71, %v989, 0
    %1097 = vmatprep.subr.mxu0 0.0
    %1098 = vmatpush1.msra.mxu0 0.0
    %1099 = vmatprep.subr.mxu0 0.0
    %1100 = vmatpush1.msra.mxu0 0.0
    %1101 = vmatprep.subr.mxu0 0.0
    %1102 = vmatpush1.msra.mxu0 0.0
    %1103 = vmatprep.subr.mxu0 0.0
    %1104 = vmatpush1.msra.mxu0 0.0
    %1105 = vmatprep.subr.mxu0 0.0
    %1106 = vmatpush1.msra.mxu0 0.0
    %1107 = vmatprep.subr.mxu0 0.0
    %1108 = vmatpush1.msra.mxu0 0.0
    %1109 = vmatprep.subr.mxu0 0.0
    %1110 = vmatpush1.msra.mxu0 0.0
    %1111 = vmatprep.subr.mxu0 0.0
    %1112 = vmatpush1.msra.mxu0 0.0
    %1113 = vmatprep.subr.mxu0 0.0
    %1114 = vmatpush1.msra.mxu0 0.0
    %1115 = vmatprep.subr.mxu0 0.0
    %1116 = vmatpush1.msra.mxu0 0.0
    %1117 = vmatprep.subr.mxu0 0.0
    %1118 = vmatpush1.msra.mxu0 0.0
    %1119 = vmatprep.subr.mxu0 0.0
    %1120 = vmatpush1.msra.mxu0 0.0
    %1121 = vmatprep.subr.mxu0 0.0
    %1122 = vmatpush1.msra.mxu0 %v54
    %1123 = vmatprep.subr.mxu0 0.0
    %1124 = vmatpush1.msra.mxu0 %v53
    %1125 = vmatprep.subr.mxu0 0.0
    %1126 = vmatpush1.msra.mxu0 %v52
    %1127 = vmatprep.subr.mxu0 0.0
    %1128 = vmatpush1.msra.mxu0 %v51
    %1129 = vmatprep.subr.mxu0 0.0
    %1130 = vmatpush2.msra.mxu0 0.0
    %1131 = vmatprep.subr.mxu0 0.0
    %1132 = vmatpush2.msra.mxu0 0.0
    %1133 = vmatprep.subr.mxu0 0.0
    %1134 = vmatpush2.msra.mxu0 0.0
    %1135 = vmatprep.subr.mxu0 0.0
    %1136 = vmatpush2.msra.mxu0 0.0
    %1137 = vmatprep.subr.mxu0 0.0
    %1138 = vmatpush2.msra.mxu0 0.0
    %1139 = vmatprep.subr.mxu0 0.0
    %1140 = vmatpush2.msra.mxu0 0.0
    %1141 = vmatprep.subr.mxu0 0.0
    %1142 = vmatpush2.msra.mxu0 0.0
    %1143 = vmatprep.subr.mxu0 0.0
    %1144 = vmatpush2.msra.mxu0 0.0
    %1145 = vmatprep.subr.mxu0 0.0
    %1146 = vmatpush2.msra.mxu0 0.0
    %1147 = vmatprep.subr.mxu0 0.0
    %1148 = vmatpush2.msra.mxu0 0.0
    %1149 = vmatprep.subr.mxu0 0.0
    %1150 = vmatpush2.msra.mxu0 0.0
    %1151 = vmatprep.subr.mxu0 0.0
    %1152 = vmatpush2.msra.mxu0 0.0
    %1153 = vmatprep.subr.mxu0 0.0
    %1154 = vmatpush2.msra.mxu0 0.0
    %1155 = vmatprep.subr.mxu0 0.0
    %1156 = vmatpush2.msra.mxu0 0.0
    %1157 = vmatprep.subr.mxu0 0.0
    %1158 = vmatpush2.msra.mxu0 0.0
    %1159 = vmatprep.subr.mxu0 0.0
    %1160 = vmatpush2.msra.mxu0 0.0
    %1161 = vmatprep.mubr.f32.mxu0 0.0
    %1162 = vmatmul.mubr.f32.gmra.mxu0 %v1095
    %v1163 = vpop.f32.mrf.mxu0
    %v1164 = vadd.f32 0.0, %v1163
    %v1165 = vpop.f32.mrf.mxu0
    %1166 = vdwg.mxu0
    %v1167 = vadd.f32 %v1094, %v1164
    %v1168 = vxor.u32 %v1167, 2147483648
    %v1169 = vmul.f32 %v1168, 1.442695
    %v1170 = vpow.pop %v1169
    %v1171 = vadd.f32 %v1170, 1.0
    %v1172 = vrcp.pop %v1171
    %v1173 = vmul.f32 1.0, %v1172
    %v1174 = vtanh.pop %v1167
    %v1175 = vmul.f32 %v1173, %v980
    %1177 = vrot.lane.b32.xlu0 %v1174, 64
    %v1178 = vpop.permute.xlu0 %1177
    %v1180 = vmul.f32 %v1173, %v1178
    %1182 = vrot.lane.b32.xlu0 %v1180, 32
    %v1183 = vpop.permute.xlu0 %1182
    %v1185 = vadd.f32 %v1175, %v1183
    %v1186 = vtanh.pop %v1185
    %1188 = vrot.lane.b32.xlu0 %v1186, 64
    %v1189 = vpop.permute.xlu0 %1188
    %v1191 = vmul.f32 %v1173, %v1189
    %1193 = vrot.lane.b32.xlu0 %v1191, 32
    %v1194 = vpop.permute.xlu0 %1193
    %1197 = vrot.lane.b32.xlu0 %v1092, 64
    %v1198 = vpop.permute.xlu0 %1197
    %v1200 = vsel %vm71, %v1194, %v1198
    %v1202 = vsel %vm175, %v1200, 0
    %1204 = vmatprep.subr.mxu0 0.0
    %1205 = vmatpush1.msra.mxu0 0.0
    %1206 = vmatprep.subr.mxu0 0.0
    %1207 = vmatpush1.msra.mxu0 0.0
    %1208 = vmatprep.subr.mxu0 0.0
    %1209 = vmatpush1.msra.mxu0 0.0
    %1210 = vmatprep.subr.mxu0 0.0
    %1211 = vmatpush1.msra.mxu0 0.0
    %1212 = vmatprep.subr.mxu0 0.0
    %1213 = vmatpush1.msra.mxu0 0.0
    %1214 = vmatprep.subr.mxu0 0.0
    %1215 = vmatpush1.msra.mxu0 0.0
    %1216 = vmatprep.subr.mxu0 0.0
    %1217 = vmatpush1.msra.mxu0 0.0
    %1218 = vmatprep.subr.mxu0 0.0
    %1219 = vmatpush1.msra.mxu0 0.0
    %1220 = vmatprep.subr.mxu0 0.0
    %1221 = vmatpush1.msra.mxu0 %v62
    %1222 = vmatprep.subr.mxu0 0.0
    %1223 = vmatpush1.msra.mxu0 %v61
    %1224 = vmatprep.subr.mxu0 0.0
    %1225 = vmatpush1.msra.mxu0 %v60
    %1226 = vmatprep.subr.mxu0 0.0
    %1227 = vmatpush1.msra.mxu0 %v59
    %1228 = vmatprep.subr.mxu0 0.0
    %1229 = vmatpush1.msra.mxu0 %v58
    %1230 = vmatprep.subr.mxu0 0.0
    %1231 = vmatpush1.msra.mxu0 %v57
    %1232 = vmatprep.subr.mxu0 0.0
    %1233 = vmatpush1.msra.mxu0 %v56
    %1234 = vmatprep.subr.mxu0 0.0
    %1235 = vmatpush1.msra.mxu0 %v55
    %1236 = vmatprep.subr.mxu0 0.0
    %1237 = vmatpush2.msra.mxu0 0.0
    %1238 = vmatprep.subr.mxu0 0.0
    %1239 = vmatpush2.msra.mxu0 0.0
    %1240 = vmatprep.subr.mxu0 0.0
    %1241 = vmatpush2.msra.mxu0 0.0
    %1242 = vmatprep.subr.mxu0 0.0
    %1243 = vmatpush2.msra.mxu0 0.0
    %1244 = vmatprep.subr.mxu0 0.0
    %1245 = vmatpush2.msra.mxu0 0.0
    %1246 = vmatprep.subr.mxu0 0.0
    %1247 = vmatpush2.msra.mxu0 0.0
    %1248 = vmatprep.subr.mxu0 0.0
    %1249 = vmatpush2.msra.mxu0 0.0
    %1250 = vmatprep.subr.mxu0 0.0
    %1251 = vmatpush2.msra.mxu0 0.0
    %1252 = vmatprep.subr.mxu0 0.0
    %1253 = vmatpush2.msra.mxu0 0.0
    %1254 = vmatprep.subr.mxu0 0.0
    %1255 = vmatpush2.msra.mxu0 0.0
    %1256 = vmatprep.subr.mxu0 0.0
    %1257 = vmatpush2.msra.mxu0 0.0
    %1258 = vmatprep.subr.mxu0 0.0
    %1259 = vmatpush2.msra.mxu0 0.0
    %1260 = vmatprep.subr.mxu0 0.0
    %1261 = vmatpush2.msra.mxu0 0.0
    %1262 = vmatprep.subr.mxu0 0.0
    %1263 = vmatpush2.msra.mxu0 0.0
    %1264 = vmatprep.subr.mxu0 0.0
    %1265 = vmatpush2.msra.mxu0 0.0
    %1266 = vmatprep.subr.mxu0 0.0
    %1267 = vmatpush2.msra.mxu0 0.0
    %1268 = vmatprep.mubr.f32.mxu0 0.0
    %1269 = vmatmul.mubr.f32.gmra.mxu0 %v1202
    %v1270 = vpop.f32.mrf.mxu0
    %v1271 = vadd.f32 %v68, %v1270
    %v1272 = vpop.f32.mrf.mxu0
    %1273 = vdwg.mxu0
    %v1274 = vxor.u32 %v1271, 2147483648
    %v1275 = vmul.f32 %v1274, 1.442695
    %v1276 = vpow.pop %v1275
    %v1277 = vadd.f32 %v1276, 1.0
    %v1278 = vrcp.pop %v1277
    %v1279 = vmul.f32 1.0, %v1278
    %v1280 = vtanh.pop %v1271
    %v1281 = vmul.f32 %v1279, %v1086
    %1283 = vrot.lane.b32.xlu0 %v1280, 64
    %v1284 = vpop.permute.xlu0 %1283
    %v1286 = vmul.f32 %v1279, %v1284
    %1288 = vrot.lane.b32.xlu0 %v1286, 32
    %v1289 = vpop.permute.xlu0 %1288
    %v1291 = vadd.f32 %v1281, %v1289
    %v1292 = vtanh.pop %v1291
    %1294 = vrot.lane.b32.xlu0 %v1292, 64
    %v1295 = vpop.permute.xlu0 %1294
    %v1297 = vmul.f32 %v1279, %v1295
    %s1298 = scalar_lea.vmem [#allocation2], 48
    %v1299 = vld [vmem:[%s1298] sm:$0xff]
    %v1300 = vsel %vm71, %v1194, 0
    %1302 = vmatprep.subr.mxu0 0.0
    %1303 = vmatpush1.msra.mxu0 0.0
    %1304 = vmatprep.subr.mxu0 0.0
    %1305 = vmatpush1.msra.mxu0 0.0
    %1306 = vmatprep.subr.mxu0 0.0
    %1307 = vmatpush1.msra.mxu0 0.0
    %1308 = vmatprep.subr.mxu0 0.0
    %1309 = vmatpush1.msra.mxu0 0.0
    %1310 = vmatprep.subr.mxu0 0.0
    %1311 = vmatpush1.msra.mxu0 0.0
    %1312 = vmatprep.subr.mxu0 0.0
    %1313 = vmatpush1.msra.mxu0 0.0
    %1314 = vmatprep.subr.mxu0 0.0
    %1315 = vmatpush1.msra.mxu0 0.0
    %1316 = vmatprep.subr.mxu0 0.0
    %1317 = vmatpush1.msra.mxu0 0.0
    %1318 = vmatprep.subr.mxu0 0.0
    %1319 = vmatpush1.msra.mxu0 0.0
    %1320 = vmatprep.subr.mxu0 0.0
    %1321 = vmatpush1.msra.mxu0 0.0
    %1322 = vmatprep.subr.mxu0 0.0
    %1323 = vmatpush1.msra.mxu0 0.0
    %1324 = vmatprep.subr.mxu0 0.0
    %1325 = vmatpush1.msra.mxu0 0.0
    %1326 = vmatprep.subr.mxu0 0.0
    %1327 = vmatpush1.msra.mxu0 %v54
    %1328 = vmatprep.subr.mxu0 0.0
    %1329 = vmatpush1.msra.mxu0 %v53
    %1330 = vmatprep.subr.mxu0 0.0
    %1331 = vmatpush1.msra.mxu0 %v52
    %1332 = vmatprep.subr.mxu0 0.0
    %1333 = vmatpush1.msra.mxu0 %v51
    %1334 = vmatprep.subr.mxu0 0.0
    %1335 = vmatpush2.msra.mxu0 0.0
    %1336 = vmatprep.subr.mxu0 0.0
    %1337 = vmatpush2.msra.mxu0 0.0
    %1338 = vmatprep.subr.mxu0 0.0
    %1339 = vmatpush2.msra.mxu0 0.0
    %1340 = vmatprep.subr.mxu0 0.0
    %1341 = vmatpush2.msra.mxu0 0.0
    %1342 = vmatprep.subr.mxu0 0.0
    %1343 = vmatpush2.msra.mxu0 0.0
    %1344 = vmatprep.subr.mxu0 0.0
    %1345 = vmatpush2.msra.mxu0 0.0
    %1346 = vmatprep.subr.mxu0 0.0
    %1347 = vmatpush2.msra.mxu0 0.0
    %1348 = vmatprep.subr.mxu0 0.0
    %1349 = vmatpush2.msra.mxu0 0.0
    %1350 = vmatprep.subr.mxu0 0.0
    %1351 = vmatpush2.msra.mxu0 0.0
    %1352 = vmatprep.subr.mxu0 0.0
    %1353 = vmatpush2.msra.mxu0 0.0
    %1354 = vmatprep.subr.mxu0 0.0
    %1355 = vmatpush2.msra.mxu0 0.0
    %1356 = vmatprep.subr.mxu0 0.0
    %1357 = vmatpush2.msra.mxu0 0.0
    %1358 = vmatprep.subr.mxu0 0.0
    %1359 = vmatpush2.msra.mxu0 0.0
    %1360 = vmatprep.subr.mxu0 0.0
    %1361 = vmatpush2.msra.mxu0 0.0
    %1362 = vmatprep.subr.mxu0 0.0
    %1363 = vmatpush2.msra.mxu0 0.0
    %1364 = vmatprep.subr.mxu0 0.0
    %1365 = vmatpush2.msra.mxu0 0.0
    %1366 = vmatprep.mubr.f32.mxu0 0.0
    %1367 = vmatmul.mubr.f32.gmra.mxu0 %v1300
    %v1368 = vpop.f32.mrf.mxu0
    %v1369 = vadd.f32 0.0, %v1368
    %v1370 = vpop.f32.mrf.mxu0
    %1371 = vdwg.mxu0
    %v1372 = vadd.f32 %v1299, %v1369
    %v1373 = vxor.u32 %v1372, 2147483648
    %v1374 = vmul.f32 %v1373, 1.442695
    %v1375 = vpow.pop %v1374
    %v1376 = vadd.f32 %v1375, 1.0
    %v1377 = vrcp.pop %v1376
    %v1378 = vmul.f32 1.0, %v1377
    %v1379 = vtanh.pop %v1372
    %v1380 = vmul.f32 %v1378, %v1185
    %1382 = vrot.lane.b32.xlu0 %v1379, 64
    %v1383 = vpop.permute.xlu0 %1382
    %v1385 = vmul.f32 %v1378, %v1383
    %1387 = vrot.lane.b32.xlu0 %v1385, 32
    %v1388 = vpop.permute.xlu0 %1387
    %v1390 = vadd.f32 %v1380, %v1388
    %v1391 = vtanh.pop %v1390
    %1393 = vrot.lane.b32.xlu0 %v1391, 64
    %v1394 = vpop.permute.xlu0 %1393
    %v1396 = vmul.f32 %v1378, %v1394
    %1398 = vrot.lane.b32.xlu0 %v1396, 32
    %v1399 = vpop.permute.xlu0 %1398
    %1402 = vrot.lane.b32.xlu0 %v1297, 64
    %v1403 = vpop.permute.xlu0 %1402
    %v1405 = vsel %vm71, %v1399, %v1403
    %v1407 = vsel %vm175, %v1405, 0
    %1409 = vmatprep.subr.mxu0 0.0
    %1410 = vmatpush1.msra.mxu0 0.0
    %1411 = vmatprep.subr.mxu0 0.0
    %1412 = vmatpush1.msra.mxu0 0.0
    %1413 = vmatprep.subr.mxu0 0.0
    %1414 = vmatpush1.msra.mxu0 0.0
    %1415 = vmatprep.subr.mxu0 0.0
    %1416 = vmatpush1.msra.mxu0 0.0
    %1417 = vmatprep.subr.mxu0 0.0
    %1418 = vmatpush1.msra.mxu0 0.0
    %1419 = vmatprep.subr.mxu0 0.0
    %1420 = vmatpush1.msra.mxu0 0.0
    %1421 = vmatprep.subr.mxu0 0.0
    %1422 = vmatpush1.msra.mxu0 0.0
    %1423 = vmatprep.subr.mxu0 0.0
    %1424 = vmatpush1.msra.mxu0 0.0
    %1425 = vmatprep.subr.mxu0 0.0
    %1426 = vmatpush1.msra.mxu0 %v62
    %1427 = vmatprep.subr.mxu0 0.0
    %1428 = vmatpush1.msra.mxu0 %v61
    %1429 = vmatprep.subr.mxu0 0.0
    %1430 = vmatpush1.msra.mxu0 %v60
    %1431 = vmatprep.subr.mxu0 0.0
    %1432 = vmatpush1.msra.mxu0 %v59
    %1433 = vmatprep.subr.mxu0 0.0
    %1434 = vmatpush1.msra.mxu0 %v58
    %1435 = vmatprep.subr.mxu0 0.0
    %1436 = vmatpush1.msra.mxu0 %v57
    %1437 = vmatprep.subr.mxu0 0.0
    %1438 = vmatpush1.msra.mxu0 %v56
    %1439 = vmatprep.subr.mxu0 0.0
    %1440 = vmatpush1.msra.mxu0 %v55
    %1441 = vmatprep.subr.mxu0 0.0
    %1442 = vmatpush2.msra.mxu0 0.0
    %1443 = vmatprep.subr.mxu0 0.0
    %1444 = vmatpush2.msra.mxu0 0.0
    %1445 = vmatprep.subr.mxu0 0.0
    %1446 = vmatpush2.msra.mxu0 0.0
    %1447 = vmatprep.subr.mxu0 0.0
    %1448 = vmatpush2.msra.mxu0 0.0
    %1449 = vmatprep.subr.mxu0 0.0
    %1450 = vmatpush2.msra.mxu0 0.0
    %1451 = vmatprep.subr.mxu0 0.0
    %1452 = vmatpush2.msra.mxu0 0.0
    %1453 = vmatprep.subr.mxu0 0.0
    %1454 = vmatpush2.msra.mxu0 0.0
    %1455 = vmatprep.subr.mxu0 0.0
    %1456 = vmatpush2.msra.mxu0 0.0
    %1457 = vmatprep.subr.mxu0 0.0
    %1458 = vmatpush2.msra.mxu0 0.0
    %1459 = vmatprep.subr.mxu0 0.0
    %1460 = vmatpush2.msra.mxu0 0.0
    %1461 = vmatprep.subr.mxu0 0.0
    %1462 = vmatpush2.msra.mxu0 0.0
    %1463 = vmatprep.subr.mxu0 0.0
    %1464 = vmatpush2.msra.mxu0 0.0
    %1465 = vmatprep.subr.mxu0 0.0
    %1466 = vmatpush2.msra.mxu0 0.0
    %1467 = vmatprep.subr.mxu0 0.0
    %1468 = vmatpush2.msra.mxu0 0.0
    %1469 = vmatprep.subr.mxu0 0.0
    %1470 = vmatpush2.msra.mxu0 0.0
    %1471 = vmatprep.subr.mxu0 0.0
    %1472 = vmatpush2.msra.mxu0 0.0
    %1473 = vmatprep.mubr.f32.mxu0 0.0
    %1474 = vmatmul.mubr.f32.gmra.mxu0 %v1407
    %v1475 = vpop.f32.mrf.mxu0
    %v1476 = vadd.f32 %v68, %v1475
    %v1477 = vpop.f32.mrf.mxu0
    %1478 = vdwg.mxu0
    %v1479 = vxor.u32 %v1476, 2147483648
    %v1480 = vmul.f32 %v1479, 1.442695
    %v1481 = vpow.pop %v1480
    %v1482 = vadd.f32 %v1481, 1.0
    %v1483 = vrcp.pop %v1482
    %v1484 = vmul.f32 1.0, %v1483
    %v1485 = vtanh.pop %v1476
    %v1486 = vmul.f32 %v1484, %v1291
    %1488 = vrot.lane.b32.xlu0 %v1485, 64
    %v1489 = vpop.permute.xlu0 %1488
    %v1491 = vmul.f32 %v1484, %v1489
    %1493 = vrot.lane.b32.xlu0 %v1491, 32
    %v1494 = vpop.permute.xlu0 %1493
    %v1496 = vadd.f32 %v1486, %v1494
    %v1497 = vtanh.pop %v1496
    %1499 = vrot.lane.b32.xlu0 %v1497, 64
    %v1500 = vpop.permute.xlu0 %1499
    %v1502 = vmul.f32 %v1484, %v1500
    %s1503 = scalar_lea.vmem [#allocation2], 56
    %v1504 = vld [vmem:[%s1503] sm:$0xff]
    %v1505 = vsel %vm71, %v1399, 0
    %1507 = vmatprep.subr.mxu0 0.0
    %1508 = vmatpush1.msra.mxu0 0.0
    %1509 = vmatprep.subr.mxu0 0.0
    %1510 = vmatpush1.msra.mxu0 0.0
    %1511 = vmatprep.subr.mxu0 0.0
    %1512 = vmatpush1.msra.mxu0 0.0
    %1513 = vmatprep.subr.mxu0 0.0
    %1514 = vmatpush1.msra.mxu0 0.0
    %1515 = vmatprep.subr.mxu0 0.0
    %1516 = vmatpush1.msra.mxu0 0.0
    %1517 = vmatprep.subr.mxu0 0.0
    %1518 = vmatpush1.msra.mxu0 0.0
    %1519 = vmatprep.subr.mxu0 0.0
    %1520 = vmatpush1.msra.mxu0 0.0
    %1521 = vmatprep.subr.mxu0 0.0
    %1522 = vmatpush1.msra.mxu0 0.0
    %1523 = vmatprep.subr.mxu0 0.0
    %1524 = vmatpush1.msra.mxu0 0.0
    %1525 = vmatprep.subr.mxu0 0.0
    %1526 = vmatpush1.msra.mxu0 0.0
    %1527 = vmatprep.subr.mxu0 0.0
    %1528 = vmatpush1.msra.mxu0 0.0
    %1529 = vmatprep.subr.mxu0 0.0
    %1530 = vmatpush1.msra.mxu0 0.0
    %1531 = vmatprep.subr.mxu0 0.0
    %1532 = vmatpush1.msra.mxu0 %v54
    %1533 = vmatprep.subr.mxu0 0.0
    %1534 = vmatpush1.msra.mxu0 %v53
    %1535 = vmatprep.subr.mxu0 0.0
    %1536 = vmatpush1.msra.mxu0 %v52
    %1537 = vmatprep.subr.mxu0 0.0
    %1538 = vmatpush1.msra.mxu0 %v51
    %1539 = vmatprep.subr.mxu0 0.0
    %1540 = vmatpush2.msra.mxu0 0.0
    %1541 = vmatprep.subr.mxu0 0.0
    %1542 = vmatpush2.msra.mxu0 0.0
    %1543 = vmatprep.subr.mxu0 0.0
    %1544 = vmatpush2.msra.mxu0 0.0
    %1545 = vmatprep.subr.mxu0 0.0
    %1546 = vmatpush2.msra.mxu0 0.0
    %1547 = vmatprep.subr.mxu0 0.0
    %1548 = vmatpush2.msra.mxu0 0.0
    %1549 = vmatprep.subr.mxu0 0.0
    %1550 = vmatpush2.msra.mxu0 0.0
    %1551 = vmatprep.subr.mxu0 0.0
    %1552 = vmatpush2.msra.mxu0 0.0
    %1553 = vmatprep.subr.mxu0 0.0
    %1554 = vmatpush2.msra.mxu0 0.0
    %1555 = vmatprep.subr.mxu0 0.0
    %1556 = vmatpush2.msra.mxu0 0.0
    %1557 = vmatprep.subr.mxu0 0.0
    %1558 = vmatpush2.msra.mxu0 0.0
    %1559 = vmatprep.subr.mxu0 0.0
    %1560 = vmatpush2.msra.mxu0 0.0
    %1561 = vmatprep.subr.mxu0 0.0
    %1562 = vmatpush2.msra.mxu0 0.0
    %1563 = vmatprep.subr.mxu0 0.0
    %1564 = vmatpush2.msra.mxu0 0.0
    %1565 = vmatprep.subr.mxu0 0.0
    %1566 = vmatpush2.msra.mxu0 0.0
    %1567 = vmatprep.subr.mxu0 0.0
    %1568 = vmatpush2.msra.mxu0 0.0
    %1569 = vmatprep.subr.mxu0 0.0
    %1570 = vmatpush2.msra.mxu0 0.0
    %1571 = vmatprep.mubr.f32.mxu0 0.0
    %1572 = vmatmul.mubr.f32.gmra.mxu0 %v1505
    %v1573 = vpop.f32.mrf.mxu0
    %v1574 = vadd.f32 0.0, %v1573
    %v1575 = vpop.f32.mrf.mxu0
    %1576 = vdwg.mxu0
    %v1577 = vadd.f32 %v1504, %v1574
    %v1578 = vxor.u32 %v1577, 2147483648
    %v1579 = vmul.f32 %v1578, 1.442695
    %v1580 = vpow.pop %v1579
    %v1581 = vadd.f32 %v1580, 1.0
    %v1582 = vrcp.pop %v1581
    %v1583 = vmul.f32 1.0, %v1582
    %v1584 = vtanh.pop %v1577
    %v1585 = vmul.f32 %v1583, %v1390
    %1587 = vrot.lane.b32.xlu0 %v1584, 64
    %v1588 = vpop.permute.xlu0 %1587
    %v1590 = vmul.f32 %v1583, %v1588
    %1592 = vrot.lane.b32.xlu0 %v1590, 32
    %v1593 = vpop.permute.xlu0 %1592
    %v1595 = vadd.f32 %v1585, %v1593
    %v1596 = vtanh.pop %v1595
    %1598 = vrot.lane.b32.xlu0 %v1596, 64
    %v1599 = vpop.permute.xlu0 %1598
    %v1601 = vmul.f32 %v1583, %v1599
    %1603 = vrot.lane.b32.xlu0 %v1601, 32
    %v1604 = vpop.permute.xlu0 %1603
    %1607 = vrot.lane.b32.xlu0 %v1502, 64
    %v1608 = vpop.permute.xlu0 %1607
    %v1610 = vsel %vm71, %v1604, %v1608
    %v1612 = vsel %vm175, %v1610, 0
    %1614 = vmatprep.subr.mxu0 0.0
    %1615 = vmatpush1.msra.mxu0 0.0
    %1616 = vmatprep.subr.mxu0 0.0
    %1617 = vmatpush1.msra.mxu0 0.0
    %1618 = vmatprep.subr.mxu0 0.0
    %1619 = vmatpush1.msra.mxu0 0.0
    %1620 = vmatprep.subr.mxu0 0.0
    %1621 = vmatpush1.msra.mxu0 0.0
    %1622 = vmatprep.subr.mxu0 0.0
    %1623 = vmatpush1.msra.mxu0 0.0
    %1624 = vmatprep.subr.mxu0 0.0
    %1625 = vmatpush1.msra.mxu0 0.0
    %1626 = vmatprep.subr.mxu0 0.0
    %1627 = vmatpush1.msra.mxu0 0.0
    %1628 = vmatprep.subr.mxu0 0.0
    %1629 = vmatpush1.msra.mxu0 0.0
    %1630 = vmatprep.subr.mxu0 0.0
    %1631 = vmatpush1.msra.mxu0 %v62
    %1632 = vmatprep.subr.mxu0 0.0
    %1633 = vmatpush1.msra.mxu0 %v61
    %1634 = vmatprep.subr.mxu0 0.0
    %1635 = vmatpush1.msra.mxu0 %v60
    %1636 = vmatprep.subr.mxu0 0.0
    %1637 = vmatpush1.msra.mxu0 %v59
    %1638 = vmatprep.subr.mxu0 0.0
    %1639 = vmatpush1.msra.mxu0 %v58
    %1640 = vmatprep.subr.mxu0 0.0
    %1641 = vmatpush1.msra.mxu0 %v57
    %1642 = vmatprep.subr.mxu0 0.0
    %1643 = vmatpush1.msra.mxu0 %v56
    %1644 = vmatprep.subr.mxu0 0.0
    %1645 = vmatpush1.msra.mxu0 %v55
    %1646 = vmatprep.subr.mxu0 0.0
    %1647 = vmatpush2.msra.mxu0 0.0
    %1648 = vmatprep.subr.mxu0 0.0
    %1649 = vmatpush2.msra.mxu0 0.0
    %1650 = vmatprep.subr.mxu0 0.0
    %1651 = vmatpush2.msra.mxu0 0.0
    %1652 = vmatprep.subr.mxu0 0.0
    %1653 = vmatpush2.msra.mxu0 0.0
    %1654 = vmatprep.subr.mxu0 0.0
    %1655 = vmatpush2.msra.mxu0 0.0
    %1656 = vmatprep.subr.mxu0 0.0
    %1657 = vmatpush2.msra.mxu0 0.0
    %1658 = vmatprep.subr.mxu0 0.0
    %1659 = vmatpush2.msra.mxu0 0.0
    %1660 = vmatprep.subr.mxu0 0.0
    %1661 = vmatpush2.msra.mxu0 0.0
    %1662 = vmatprep.subr.mxu0 0.0
    %1663 = vmatpush2.msra.mxu0 0.0
    %1664 = vmatprep.subr.mxu0 0.0
    %1665 = vmatpush2.msra.mxu0 0.0
    %1666 = vmatprep.subr.mxu0 0.0
    %1667 = vmatpush2.msra.mxu0 0.0
    %1668 = vmatprep.subr.mxu0 0.0
    %1669 = vmatpush2.msra.mxu0 0.0
    %1670 = vmatprep.subr.mxu0 0.0
    %1671 = vmatpush2.msra.mxu0 0.0
    %1672 = vmatprep.subr.mxu0 0.0
    %1673 = vmatpush2.msra.mxu0 0.0
    %1674 = vmatprep.subr.mxu0 0.0
    %1675 = vmatpush2.msra.mxu0 0.0
    %1676 = vmatprep.subr.mxu0 0.0
    %1677 = vmatpush2.msra.mxu0 0.0
    %1678 = vmatprep.mubr.f32.mxu0 0.0
    %1679 = vmatmul.mubr.f32.gmra.mxu0 %v1612
    %v1680 = vpop.f32.mrf.mxu0
    %v1681 = vadd.f32 %v68, %v1680
    %v1682 = vpop.f32.mrf.mxu0
    %1683 = vdwg.mxu0
    %v1684 = vxor.u32 %v1681, 2147483648
    %v1685 = vmul.f32 %v1684, 1.442695
    %v1686 = vpow.pop %v1685
    %v1687 = vadd.f32 %v1686, 1.0
    %v1688 = vrcp.pop %v1687
    %v1689 = vmul.f32 1.0, %v1688
    %v1690 = vtanh.pop %v1681
    %v1691 = vmul.f32 %v1689, %v1496
    %1693 = vrot.lane.b32.xlu0 %v1690, 64
    %v1694 = vpop.permute.xlu0 %1693
    %v1696 = vmul.f32 %v1689, %v1694
    %1698 = vrot.lane.b32.xlu0 %v1696, 32
    %v1699 = vpop.permute.xlu0 %1698
    %v1701 = vadd.f32 %v1691, %v1699
    %v1702 = vtanh.pop %v1701
    %1704 = vrot.lane.b32.xlu0 %v1702, 64
    %v1705 = vpop.permute.xlu0 %1704
    %v1707 = vmul.f32 %v1689, %v1705
    %v1708 = vld [vmem:[%s4] sm:$0xff]
    %v1709 = vld [vmem:[%s4 + $0x8] sm:$0xff]
    %v1710 = vld [vmem:[%s4 + $0x10] sm:$0xff]
    %v1711 = vld [vmem:[%s4 + $0x18] sm:$0xff]
    %v1712 = vld [vmem:[%s5] sm:$0x1]
    %v1714 = vlaneseq
    %v1715 = vshrl.u32 %v1714, 7
    %v1716 = vsub.s32 0, %v1715
    %v1717 = vrot.slane %v1712, %v1716
    %1720 = vrot.lane.b32.xlu0 %v1707, 32
    %v1721 = vpop.permute.xlu0 %1720
    %v1722 = vsel %vm71, %v1721, 0
    %1724 = vmatprep.subr.mxu0 0.0
    %1725 = vmatpush1.msra.mxu0 0.0
    %1726 = vmatprep.subr.mxu0 0.0
    %1727 = vmatpush1.msra.mxu0 0.0
    %1728 = vmatprep.subr.mxu0 0.0
    %1729 = vmatpush1.msra.mxu0 0.0
    %1730 = vmatprep.subr.mxu0 0.0
    %1731 = vmatpush1.msra.mxu0 0.0
    %1732 = vmatprep.subr.mxu0 0.0
    %1733 = vmatpush1.msra.mxu0 0.0
    %1734 = vmatprep.subr.mxu0 0.0
    %1735 = vmatpush1.msra.mxu0 0.0
    %1736 = vmatprep.subr.mxu0 0.0
    %1737 = vmatpush1.msra.mxu0 0.0
    %1738 = vmatprep.subr.mxu0 0.0
    %1739 = vmatpush1.msra.mxu0 0.0
    %1740 = vmatprep.subr.mxu0 0.0
    %1741 = vmatpush1.msra.mxu0 0.0
    %1742 = vmatprep.subr.mxu0 0.0
    %1743 = vmatpush1.msra.mxu0 0.0
    %1744 = vmatprep.subr.mxu0 0.0
    %1745 = vmatpush1.msra.mxu0 0.0
    %1746 = vmatprep.subr.mxu0 0.0
    %1747 = vmatpush1.msra.mxu0 0.0
    %1748 = vmatprep.subr.mxu0 0.0
    %1749 = vmatpush1.msra.mxu0 %v1711
    %1750 = vmatprep.subr.mxu0 0.0
    %1751 = vmatpush1.msra.mxu0 %v1710
    %1752 = vmatprep.subr.mxu0 0.0
    %1753 = vmatpush1.msra.mxu0 %v1709
    %1754 = vmatprep.subr.mxu0 0.0
    %1755 = vmatpush1.msra.mxu0 %v1708
    %1756 = vmatprep.subr.mxu0 0.0
    %1757 = vmatpush2.msra.mxu0 0.0
    %1758 = vmatprep.subr.mxu0 0.0
    %1759 = vmatpush2.msra.mxu0 0.0
    %1760 = vmatprep.subr.mxu0 0.0
    %1761 = vmatpush2.msra.mxu0 0.0
    %1762 = vmatprep.subr.mxu0 0.0
    %1763 = vmatpush2.msra.mxu0 0.0
    %1764 = vmatprep.subr.mxu0 0.0
    %1765 = vmatpush2.msra.mxu0 0.0
    %1766 = vmatprep.subr.mxu0 0.0
    %1767 = vmatpush2.msra.mxu0 0.0
    %1768 = vmatprep.subr.mxu0 0.0
    %1769 = vmatpush2.msra.mxu0 0.0
    %1770 = vmatprep.subr.mxu0 0.0
    %1771 = vmatpush2.msra.mxu0 0.0
    %1772 = vmatprep.subr.mxu0 0.0
    %1773 = vmatpush2.msra.mxu0 0.0
    %1774 = vmatprep.subr.mxu0 0.0
    %1775 = vmatpush2.msra.mxu0 0.0
    %1776 = vmatprep.subr.mxu0 0.0
    %1777 = vmatpush2.msra.mxu0 0.0
    %1778 = vmatprep.subr.mxu0 0.0
    %1779 = vmatpush2.msra.mxu0 0.0
    %1780 = vmatprep.subr.mxu0 0.0
    %1781 = vmatpush2.msra.mxu0 0.0
    %1782 = vmatprep.subr.mxu0 0.0
    %1783 = vmatpush2.msra.mxu0 0.0
    %1784 = vmatprep.subr.mxu0 0.0
    %1785 = vmatpush2.msra.mxu0 0.0
    %1786 = vmatprep.subr.mxu0 0.0
    %1787 = vmatpush2.msra.mxu0 0.0
    %1788 = vmatprep.mubr.f32.mxu0 0.0
    %1789 = vmatmul.mubr.f32.gmra.mxu0 %v1722
    %v1790 = vpop.f32.mrf.mxu0
    %v1791 = vadd.f32 %v1717, %v1790
    %v1792 = vpop.f32.mrf.mxu0
    %1793 = vdwg.mxu0
    %vm1794 = vcmask 31744
    %v1795 = vsel %vm1794, %v1791, -inf
    %1796 = vmax.xlane.f32.xlu0 %v1795
    %v1797 = vpop.xlane.xlu0 %1796
    %v1798 = vsub.f32 %v1791, %v1797
    %v1799 = vmul.f32 %v1798, 1.442695
    %v1800 = vpow.pop %v1799
    %v1801 = vsel %vm1794, %v1800, 0.0
    %1802 = vadd.xlane.f32.xlu0 %v1801
    %v1803 = vpop.xlane.xlu0 %1802
    %v1804 = vrcp.pop %v1803
    %v1805 = vmul.f32 %v1800, %v1804
    %1806 = vst.msk [vmem:[%s6] sm:$0xff] %vm1794, %v1805
    // Predicated region
    $region34: #{tpu_custom_call.1} parent=1 // pred_check
      _
    $region35: #{tpu_custom_call.1} parent=1 // pred_check_branch
      %1808 = sbr.rel (0) target = $region37
    $region36: #{tpu_custom_call.1} parent=1 // pred_region
      _
    $region37: #{tpu_custom_call.1} parent=1 // pred_fallthru
      _
    // Predicated region
    $region38: #{tpu_custom_call.1} parent=1 // pred_check
      _
    $region39: #{tpu_custom_call.1} parent=1 // pred_check_branch
      %1810 = sbr.rel (0) target = $region41
    $region40: #{tpu_custom_call.1} parent=1 // pred_region
      _
    $region41: #{tpu_custom_call.1} parent=1 // pred_fallthru
      _
    %1811 = vsyncpa [#allocation3], 1
    %1812 = vsyncpa [#allocation5], 1

</llo_original>
